<compile_context>
chip_gen: v7x
topology: tpu7x:2x2x1
jax: 0.10.0
libtpu: 0.0.40
codegen_flags: <defaults>
</compile_context>

<pallas_src>
import functools

import jax
import jax.numpy as jnp
from jax import lax
from jax.experimental import pallas as pl
from jax.experimental.pallas import tpu as pltpu

_NEG_BIG = -1e30


def _round_up(x, m):
    return (x + m - 1) // m * m


def _vmem_limit_bytes():
    cap = 64 * 1024 * 1024          # conservative default (v7x per-TC VMEM)
    try:
        info = pltpu.get_tpu_info()
        cap = int(getattr(info, "vmem_capacity_bytes", cap) or cap)
    except Exception:
        pass
    return min(cap * 7 // 8, 100 * 1024 * 1024)


def _select_tiles(b_pad, d_pad, bpe, budget_bytes):
    """Largest (row, col) tile pair that fits the VMEM budget.

    The row tile is the roofline lever (ft HBM reads scale as B_pad/TR), so it
    is maximised first; the column tile then grows as far as the budget
    allows, up to the full B_pad, which makes the transposed-feature slab
    resident in VMEM and loaded exactly once (the v5e/v6e "resident ft" mode).
    """
    row_cands = [c for c in (1024, 512, 256, 128)
                 if c <= b_pad and b_pad % c == 0]
    col_cands = sorted({c for c in (b_pad, 2048, 1024, 512, 256, 128)
                        if c <= b_pad and b_pad % c == 0}, reverse=True)
    for tr in row_cands:
        for tc in col_cands:
            need = (2 * tr * d_pad * bpe       # feature rows (double-buffered)
                    + 2 * d_pad * tc * bpe     # featuresT columns (double-buffered)
                    + 6 * tr * tc * 4          # live f32 (TR, TC) temporaries
                    + 32 * (tr + tc) * 4)      # row/col vectors + scratch slack
            if need <= budget_bytes:
                return tr, tc
    return 128, 128


def _debias_supcon_kernel(f_ref, ft_ref, labr_ref, labc_ref, biar_ref,
                          biac_ref, colm_ref, pcnt_ref, out_ref,
                          m_sc, s_sc, pml_sc, *, tr, tc):
    i = pl.program_id(0)
    j = pl.program_id(1)

    @pl.when(j == 0)
    def _init():
        m_sc[...] = jnp.full(m_sc.shape, _NEG_BIG, jnp.float32)
        s_sc[...] = jnp.zeros(s_sc.shape, jnp.float32)
        pml_sc[...] = jnp.zeros(pml_sc.shape, jnp.float32)

    # Logits tile on the MXU. The LHS rows are pre-scaled by 1/T and the RHS
    # is the pre-transposed (D, B_pad) copy, so no in-kernel cast/scale/transp.
    sim = jnp.dot(f_ref[...], ft_ref[...],
                  preferred_element_type=jnp.float32)             # (TR, TC) f32

    # Additive validity mask: 0 for real columns, -1e30 for padding.
    sim_v = sim + colm_ref[...]

    # Online (flash-style) row max / exp-sum. The reference takes the row max
    # over the full row (diagonal included), so the max uses sim_v; the
    # exp-sum excludes the diagonal exactly by pushing it to -inf before exp.
    m_prev = m_sc[...]
    m_new = jnp.maximum(m_prev, jnp.max(sim_v, axis=1, keepdims=True))
    alpha = jnp.exp(m_prev - m_new)
    m_sc[...] = m_new

    # Only tiles that intersect the diagonal pay for the iota/compare/select.
    on_diag = (j * tc < i * tr + tr) & (i * tr < j * tc + tc)

    @pl.when(on_diag)
    def _diag_tile():
        rr = lax.broadcasted_iota(jnp.int32, (tr, tc), 0)
        cc = lax.broadcasted_iota(jnp.int32, (tr, tc), 1)
        is_diag = (rr - cc) == (j * tc - i * tr)
        p = jnp.exp(jnp.where(is_diag, _NEG_BIG, sim_v) - m_new)
        s_sc[...] = alpha * s_sc[...] + jnp.sum(p, axis=1, keepdims=True)

    @pl.when(jnp.logical_not(on_diag))
    def _off_diag_tile():
        p = jnp.exp(sim_v - m_new)
        s_sc[...] = alpha * s_sc[...] + jnp.sum(p, axis=1, keepdims=True)

    # Positives: same label AND different bias. The diagonal is excluded by
    # bias_i != bias_i == False; padded columns by the label = -1 sentinel.
    pos_mask = ((labr_ref[...] == labc_ref[...]) &
                (biar_ref[...] != biac_ref[...]))                 # (TR, TC)
    pml_sc[...] += jnp.sum(jnp.where(pos_mask, sim, 0.0), axis=1, keepdims=True)

    @pl.when(j == pl.num_programs(1) - 1)
    def _finalize():
        pm = pcnt_ref[...]                                        # (TR, 1)
        pm_safe = jnp.where(pm == 0.0, 1.0, pm)
        lse = m_sc[...] + jnp.log(s_sc[...] + 1e-9)
        # sum(mask * log_prob) = sum(mask * sim) - (max + log_denom) * sum(mask)
        out_ref[...] = (lse * pm - pml_sc[...]) / pm_safe


def debias_supcon_loss_uni(features, labels, biases, temperature=0.07,
                           matmul_dtype=None):
    """Pallas TPU implementation of DebiasSupConLossUni.forward.

    features: (B, D) float array
    labels:   (B,)  int array
    biases:   (B,)  int array
    returns scalar float32 loss
    """
    b, d = features.shape
    b_pad = _round_up(b, 128)
    d_pad = _round_up(d, 128)

    # bf16 matmul operands (f32 accumulation) when the caller already uses a
    # 16-bit dtype or requests it; f32 otherwise for exact reference parity.
    if matmul_dtype is None:
        matmul_dtype = (jnp.bfloat16 if jnp.dtype(features.dtype).itemsize <= 2
                        else jnp.float32)
    bpe = jnp.dtype(matmul_dtype).itemsize
    inv_t = 1.0 / float(temperature)

    # All pad / cast / scale work happens once here (fused XLA elementwise):
    #  * ft is the pre-transposed RHS so the MXU contracts on its leading dim.
    #  * 1/temperature is folded into the LHS only (folding into both would
    #    square it), so the kernel never multiplies the logits tile.
    f32 = jnp.zeros((b_pad, d_pad), jnp.float32).at[:b, :d].set(
        features.astype(jnp.float32))
    ft = f32.astype(matmul_dtype).T                          # (D_pad, B_pad)
    f_rows = (f32 * inv_t).astype(matmul_dtype)              # (B_pad, D_pad)

    li = labels.reshape(-1).astype(jnp.int32)
    bi = biases.reshape(-1).astype(jnp.int32)
    # Padded columns get label = -1: with "same label AND different bias" they
    # can never be positives, so the kernel needs no validity select for pos.
    lab = jnp.full((b_pad,), -1, jnp.int32).at[:b].set(li)
    bia = jnp.zeros((b_pad,), jnp.int32).at[:b].set(bi)
    # Additive softmax mask: 0 for real columns, -1e30 for padding.
    colmask = jnp.where(jnp.arange(b_pad) < b, 0.0, _NEG_BIG).astype(jnp.float32)

    # Per-row positive counts only depend on labels/biases: hoisted out of the
    # kernel (removes one cross-lane reduction and one scratch buffer per
    # tile).  TODO(synk): switch to O(B log B) per-(label,bias) group counts if
    # B ever grows enough for this O(B^2) XLA reduction to matter.
    pos_cnt = jnp.sum((li[:, None] == li[None, :]) & (bi[:, None] != bi[None, :]),
                      axis=1).astype(jnp.float32)
    pcnt = jnp.zeros((b_pad,), jnp.float32).at[:b].set(pos_cnt)

    vmem_limit = _vmem_limit_bytes()
    tr, tc = _select_tiles(b_pad, d_pad, bpe, (vmem_limit * 3) // 4)
    grid = (b_pad // tr, b_pad // tc)

    kernel = functools.partial(_debias_supcon_kernel, tr=tr, tc=tc)

    per_row = pl.pallas_call(
        kernel,
        out_shape=jax.ShapeDtypeStruct((b_pad, 1), jnp.float32),
        grid_spec=pltpu.PrefetchScalarGridSpec(
            num_scalar_prefetch=0,
            grid=grid,
            in_specs=[
                pl.BlockSpec((tr, d_pad), lambda i, j: (i, 0)),  # rows (1/T folded)
                pl.BlockSpec((d_pad, tc), lambda i, j: (0, j)),  # featuresT cols
                pl.BlockSpec((tr, 1), lambda i, j: (i, 0)),      # labels (rows)
                pl.BlockSpec((1, tc), lambda i, j: (0, j)),      # labels (cols)
                pl.BlockSpec((tr, 1), lambda i, j: (i, 0)),      # biases (rows)
                pl.BlockSpec((1, tc), lambda i, j: (0, j)),      # biases (cols)
                pl.BlockSpec((1, tc), lambda i, j: (0, j)),      # additive col mask
                pl.BlockSpec((tr, 1), lambda i, j: (i, 0)),      # positive counts
            ],
            out_specs=pl.BlockSpec((tr, 1), lambda i, j: (i, 0)),
            scratch_shapes=[pltpu.VMEM((tr, 1), jnp.float32)] * 3,
        ),
        compiler_params=pltpu.CompilerParams(
            dimension_semantics=("parallel", "arbitrary"),
            vmem_limit_bytes=vmem_limit),
    )(f_rows, ft,
      lab.reshape(b_pad, 1), lab.reshape(1, b_pad),
      bia.reshape(b_pad, 1), bia.reshape(1, b_pad),
      colmask.reshape(1, b_pad), pcnt.reshape(b_pad, 1))

    # Tiny final mean over the B valid rows in plain XLA (keep the [:b] slice:
    # fully-padded rows hold garbage by design).
    return jnp.mean(per_row[:b, 0])


def _reference(features, labels, biases, temperature=0.07):
    # Pure-JAX reference mirroring the PyTorch module, for a sanity check.
    b = features.shape[0]
    labels = labels.reshape(-1, 1)
    biases = biases.reshape(-1, 1)
    label_mask = (labels == labels.T)
    bias_mask = (biases != biases.T)
    mask = (label_mask & bias_mask).astype(jnp.float32)
    feats = features.astype(jnp.float32)
    adc = (feats @ feats.T) / temperature
    logits = adc - jnp.max(adc, axis=1, keepdims=True)
    logits_mask = 1.0 - jnp.eye(b, dtype=jnp.float32)
    mask = mask * logits_mask
    exp_logits = jnp.exp(logits) * logits_mask
    log_prob = logits - jnp.log(exp_logits.sum(1, keepdims=True) + 1e-9)
    sum_mask = mask.sum(1)
    sum_mask = jnp.where(sum_mask == 0, 1.0, sum_mask)
    mean_log_prob_pos = (mask * log_prob).sum(1) / sum_mask
    return jnp.mean(-mean_log_prob_pos)


if __name__ == "__main__":
    key = jax.random.PRNGKey(0)
    kf, kl, kb = jax.random.split(key, 3)

    B, D = 8, 32
    features = jax.random.normal(kf, (B, D), dtype=jnp.float32)
    # L2-normalize features as is conventional for SupCon inputs.
    features = features / jnp.linalg.norm(features, axis=1, keepdims=True)
    labels = jax.random.randint(kl, (B,), 0, 3, dtype=jnp.int32)
    biases = jax.random.randint(kb, (B,), 0, 2, dtype=jnp.int32)

    # f32-operand path: tight parity with the reference.
    loss = jax.block_until_ready(
        debias_supcon_loss_uni(features, labels, biases, temperature=0.07))
    ref = _reference(features, labels, biases, temperature=0.07)
    assert jnp.allclose(loss, ref, rtol=1e-4, atol=1e-4), (loss, ref)

    # bf16-operand path (full-rate MXU on v6e/v7x); f32 accumulation, so only
    # input rounding differs -- validated at a loose tolerance as advised.
    loss_bf16 = jax.block_until_ready(
        debias_supcon_loss_uni(features, labels, biases, temperature=0.07,
                               matmul_dtype=jnp.bfloat16))
    assert jnp.allclose(loss_bf16, ref, rtol=5e-2, atol=2e-1), (loss_bf16, ref)

    print("KERNEL_OK")
</pallas_src>

<mosaic_0001>
module attributes {stable_mosaic.version = 11 : i64} {
  func.func @_debias_supcon_kernel(%arg0: i32, %arg1: i32, %arg2: memref<128x128xf32, #tpu.memory_space<vmem>>, %arg3: memref<128x128xf32, #tpu.memory_space<vmem>>, %arg4: memref<128x1xi32, #tpu.memory_space<vmem>>, %arg5: memref<1x128xi32, #tpu.memory_space<vmem>>, %arg6: memref<128x1xi32, #tpu.memory_space<vmem>>, %arg7: memref<1x128xi32, #tpu.memory_space<vmem>>, %arg8: memref<1x128xf32, #tpu.memory_space<vmem>>, %arg9: memref<128x1xf32, #tpu.memory_space<vmem>>, %arg10: memref<128x1xf32, #tpu.memory_space<vmem>>, %arg11: memref<128x1xf32, #tpu.memory_space<vmem>>, %arg12: memref<128x1xf32, #tpu.memory_space<vmem>>, %arg13: memref<128x1xf32, #tpu.memory_space<vmem>>) attributes {dimension_semantics = [#tpu.dimension_semantics<parallel>, #tpu.dimension_semantics<arbitrary>], iteration_bounds = array<i64: 1, 1>, scalar_prefetch = 0 : i64, scratch_operands = 3 : i64, tpu.core_type = #tpu.core_type<tc>, window_params = [{transform_indices = @transform_0, window_bounds = array<i64: 128, 128>}, {transform_indices = @transform_1, window_bounds = array<i64: 128, 128>}, {transform_indices = @transform_2, window_bounds = array<i64: 128, 1>}, {transform_indices = @transform_3, window_bounds = array<i64: 1, 128>}, {transform_indices = @transform_4, window_bounds = array<i64: 128, 1>}, {transform_indices = @transform_5, window_bounds = array<i64: 1, 128>}, {transform_indices = @transform_6, window_bounds = array<i64: 1, 128>}, {transform_indices = @transform_7, window_bounds = array<i64: 128, 1>}, {transform_indices = @transform_8, window_bounds = array<i64: 128, 1>}]} {
    %c0_i32 = arith.constant 0 : i32
    %0 = arith.cmpi eq, %arg1, %c0_i32 : i32
    %1 = arith.extui %0 : i1 to i32
    %c0_i32_0 = arith.constant 0 : i32
    %2 = arith.cmpi ne, %1, %c0_i32_0 : i32
    scf.if %2 {
      %cst_34 = arith.constant -1.000000e+30 : f32
      %51 = vector.broadcast %cst_34 : f32 to vector<128x1xf32>
      %c0_35 = arith.constant 0 : index
      %c0_36 = arith.constant 0 : index
      %52 = vector.load %arg11[%c0_35, %c0_36] : memref<128x1xf32, #tpu.memory_space<vmem>>, vector<128x1xf32>
      tpu.vector_store %arg11[%c0_35, %c0_36], %51 {strides = array<i32>} : memref<128x1xf32, #tpu.memory_space<vmem>>, vector<128x1xf32>,
      %cst_37 = arith.constant 0.000000e+00 : f32
      %53 = vector.broadcast %cst_37 : f32 to vector<128x1xf32>
      %c0_38 = arith.constant 0 : index
      %c0_39 = arith.constant 0 : index
      %54 = vector.load %arg12[%c0_38, %c0_39] : memref<128x1xf32, #tpu.memory_space<vmem>>, vector<128x1xf32>
      tpu.vector_store %arg12[%c0_38, %c0_39], %53 {strides = array<i32>} : memref<128x1xf32, #tpu.memory_space<vmem>>, vector<128x1xf32>,
      %cst_40 = arith.constant 0.000000e+00 : f32
      %55 = vector.broadcast %cst_40 : f32 to vector<128x1xf32>
      %c0_41 = arith.constant 0 : index
      %c0_42 = arith.constant 0 : index
      %56 = vector.load %arg13[%c0_41, %c0_42] : memref<128x1xf32, #tpu.memory_space<vmem>>, vector<128x1xf32>
      tpu.vector_store %arg13[%c0_41, %c0_42], %55 {strides = array<i32>} : memref<128x1xf32, #tpu.memory_space<vmem>>, vector<128x1xf32>,
    } else {
    }
    %c0 = arith.constant 0 : index
    %c0_1 = arith.constant 0 : index
    %3 = vector.load %arg2[%c0, %c0_1] : memref<128x128xf32, #tpu.memory_space<vmem>>, vector<128x128xf32>
    %c0_2 = arith.constant 0 : index
    %c0_3 = arith.constant 0 : index
    %4 = vector.load %arg3[%c0_2, %c0_3] : memref<128x128xf32, #tpu.memory_space<vmem>>, vector<128x128xf32>
    %cst = arith.constant dense<0.000000e+00> : vector<128x128xf32>
    %5 = tpu.matmul %3, %4, %cst {dimension_numbers = #tpu.dot_dimension_numbers<[1], [0], [0], [1], [0, 0, 1, 1], [], []>} : vector<128x128xf32>, vector<128x128xf32>, vector<128x128xf32> -> vector<128x128xf32>
    %c0_4 = arith.constant 0 : index
    %c0_5 = arith.constant 0 : index
    %6 = vector.load %arg8[%c0_4, %c0_5] : memref<1x128xf32, #tpu.memory_space<vmem>>, vector<1x128xf32>
    %7 = vector.broadcast %6 : vector<1x128xf32> to vector<128x128xf32>
    %8 = arith.addf %5, %7 : vector<128x128xf32>
    %c0_6 = arith.constant 0 : index
    %c0_7 = arith.constant 0 : index
    %9 = vector.load %arg11[%c0_6, %c0_7] : memref<128x1xf32, #tpu.memory_space<vmem>>, vector<128x1xf32>
    %cst_8 = arith.constant dense<0xFF800000> : vector<128xf32>
    %10 = vector.multi_reduction <maximumf>, %8, %cst_8 [1] : vector<128x128xf32> to vector<128xf32>
    %11 = vector.shape_cast %10 : vector<128xf32> to vector<128x1xf32>
    %12 = arith.maximumf %9, %11 : vector<128x1xf32>
    %13 = arith.subf %9, %12 : vector<128x1xf32>
    %14 = math.exp %13 : vector<128x1xf32>
    %c0_9 = arith.constant 0 : index
    %c0_10 = arith.constant 0 : index
    %15 = vector.load %arg11[%c0_9, %c0_10] : memref<128x1xf32, #tpu.memory_space<vmem>>, vector<128x1xf32>
    tpu.vector_store %arg11[%c0_9, %c0_10], %12 {strides = array<i32>} : memref<128x1xf32, #tpu.memory_space<vmem>>, vector<128x1xf32>,
    %c128_i32 = arith.constant 128 : i32
    %16 = arith.muli %arg1, %c128_i32 : i32
    %c128_i32_11 = arith.constant 128 : i32
    %17 = arith.muli %arg0, %c128_i32_11 : i32
    %c128_i32_12 = arith.constant 128 : i32
    %18 = arith.addi %17, %c128_i32_12 : i32
    %19 = arith.cmpi slt, %16, %18 : i32
    %c128_i32_13 = arith.constant 128 : i32
    %20 = arith.muli %arg0, %c128_i32_13 : i32
    %c128_i32_14 = arith.constant 128 : i32
    %21 = arith.muli %arg1, %c128_i32_14 : i32
    %c128_i32_15 = arith.constant 128 : i32
    %22 = arith.addi %21, %c128_i32_15 : i32
    %23 = arith.cmpi slt, %20, %22 : i32
    %24 = arith.andi %19, %23 : i1
    %25 = arith.extui %24 : i1 to i32
    %c0_i32_16 = arith.constant 0 : i32
    %26 = arith.cmpi ne, %25, %c0_i32_16 : i32
    scf.if %26 {
      %51 = tpu.iota {dimensions = array<i32: 0>} : vector<128x128xi32>
      %52 = tpu.iota {dimensions = array<i32: 1>} : vector<128x128xi32>
      %53 = arith.subi %51, %52 : vector<128x128xi32>
      %c128_i32_34 = arith.constant 128 : i32
      %54 = arith.muli %arg1, %c128_i32_34 : i32
      %c128_i32_35 = arith.constant 128 : i32
      %55 = arith.muli %arg0, %c128_i32_35 : i32
      %56 = arith.subi %54, %55 : i32
      %57 = vector.broadcast %56 : i32 to vector<128x128xi32>
      %58 = arith.cmpi eq, %53, %57 : vector<128x128xi32>
      %cst_36 = arith.constant -1.000000e+30 : f32
      %59 = vector.broadcast %cst_36 : f32 to vector<128x128xf32>
      %60 = arith.select %58, %59, %8 : vector<128x128xi1>, vector<128x128xf32>
      %61 = vector.broadcast %12 : vector<128x1xf32> to vector<128x128xf32>
      %62 = arith.subf %60, %61 : vector<128x128xf32>
      %63 = math.exp %62 : vector<128x128xf32>
      %c0_37 = arith.constant 0 : index
      %c0_38 = arith.constant 0 : index
      %64 = vector.load %arg12[%c0_37, %c0_38] : memref<128x1xf32, #tpu.memory_space<vmem>>, vector<128x1xf32>
      %65 = arith.mulf %14, %64 : vector<128x1xf32>
      %cst_39 = arith.constant dense<0.000000e+00> : vector<128xf32>
      %66 = vector.multi_reduction <add>, %63, %cst_39 [1] : vector<128x128xf32> to vector<128xf32>
      %67 = vector.shape_cast %66 : vector<128xf32> to vector<128x1xf32>
      %68 = arith.addf %65, %67 : vector<128x1xf32>
      %c0_40 = arith.constant 0 : index
      %c0_41 = arith.constant 0 : index
      %69 = vector.load %arg12[%c0_40, %c0_41] : memref<128x1xf32, #tpu.memory_space<vmem>>, vector<128x1xf32>
      tpu.vector_store %arg12[%c0_40, %c0_41], %68 {strides = array<i32>} : memref<128x1xf32, #tpu.memory_space<vmem>>, vector<128x1xf32>,
    } else {
    }
    %true = arith.constant true
    %27 = arith.xori %24, %true : i1
    %28 = arith.extui %27 : i1 to i32
    %c0_i32_17 = arith.constant 0 : i32
    %29 = arith.cmpi ne, %28, %c0_i32_17 : i32
    scf.if %29 {
      %51 = vector.broadcast %12 : vector<128x1xf32> to vector<128x128xf32>
      %52 = arith.subf %8, %51 : vector<128x128xf32>
      %53 = math.exp %52 : vector<128x128xf32>
      %c0_34 = arith.constant 0 : index
      %c0_35 = arith.constant 0 : index
      %54 = vector.load %arg12[%c0_34, %c0_35] : memref<128x1xf32, #tpu.memory_space<vmem>>, vector<128x1xf32>
      %55 = arith.mulf %14, %54 : vector<128x1xf32>
      %cst_36 = arith.constant dense<0.000000e+00> : vector<128xf32>
      %56 = vector.multi_reduction <add>, %53, %cst_36 [1] : vector<128x128xf32> to vector<128xf32>
      %57 = vector.shape_cast %56 : vector<128xf32> to vector<128x1xf32>
      %58 = arith.addf %55, %57 : vector<128x1xf32>
      %c0_37 = arith.constant 0 : index
      %c0_38 = arith.constant 0 : index
      %59 = vector.load %arg12[%c0_37, %c0_38] : memref<128x1xf32, #tpu.memory_space<vmem>>, vector<128x1xf32>
      tpu.vector_store %arg12[%c0_37, %c0_38], %58 {strides = array<i32>} : memref<128x1xf32, #tpu.memory_space<vmem>>, vector<128x1xf32>,
    } else {
    }
    %c0_18 = arith.constant 0 : index
    %c0_19 = arith.constant 0 : index
    %30 = vector.load %arg4[%c0_18, %c0_19] : memref<128x1xi32, #tpu.memory_space<vmem>>, vector<128x1xi32>
    %c0_20 = arith.constant 0 : index
    %c0_21 = arith.constant 0 : index
    %31 = vector.load %arg5[%c0_20, %c0_21] : memref<1x128xi32, #tpu.memory_space<vmem>>, vector<1x128xi32>
    %32 = vector.broadcast %30 : vector<128x1xi32> to vector<128x128xi32>
    %33 = vector.broadcast %31 : vector<1x128xi32> to vector<128x128xi32>
    %34 = arith.cmpi eq, %32, %33 : vector<128x128xi32>
    %c0_22 = arith.constant 0 : index
    %c0_23 = arith.constant 0 : index
    %35 = vector.load %arg6[%c0_22, %c0_23] : memref<128x1xi32, #tpu.memory_space<vmem>>, vector<128x1xi32>
    %c0_24 = arith.constant 0 : index
    %c0_25 = arith.constant 0 : index
    %36 = vector.load %arg7[%c0_24, %c0_25] : memref<1x128xi32, #tpu.memory_space<vmem>>, vector<1x128xi32>
    %37 = vector.broadcast %35 : vector<128x1xi32> to vector<128x128xi32>
    %38 = vector.broadcast %36 : vector<1x128xi32> to vector<128x128xi32>
    %39 = arith.cmpi ne, %37, %38 : vector<128x128xi32>
    %40 = arith.andi %34, %39 : vector<128x128xi1>
    %c0_26 = arith.constant 0 : index
    %c0_27 = arith.constant 0 : index
    %41 = vector.load %arg13[%c0_26, %c0_27] : memref<128x1xf32, #tpu.memory_space<vmem>>, vector<128x1xf32>
    %cst_28 = arith.constant 0.000000e+00 : f32
    %42 = vector.broadcast %cst_28 : f32 to vector<128x128xf32>
    %43 = arith.select %40, %5, %42 : vector<128x128xi1>, vector<128x128xf32>
    %cst_29 = arith.constant dense<0.000000e+00> : vector<128xf32>
    %44 = vector.multi_reduction <add>, %43, %cst_29 [1] : vector<128x128xf32> to vector<128xf32>
    %45 = vector.shape_cast %44 : vector<128xf32> to vector<128x1xf32>
    %46 = arith.addf %41, %45 : vector<128x1xf32>
    %c0_30 = arith.constant 0 : index
    %c0_31 = arith.constant 0 : index
    %47 = vector.load %arg13[%c0_30, %c0_31] : memref<128x1xf32, #tpu.memory_space<vmem>>, vector<128x1xf32>
    tpu.vector_store %arg13[%c0_30, %c0_31], %46 {strides = array<i32>} : memref<128x1xf32, #tpu.memory_space<vmem>>, vector<128x1xf32>,
    %c0_i32_32 = arith.constant 0 : i32
    %48 = arith.cmpi eq, %arg1, %c0_i32_32 : i32
    %49 = arith.extui %48 : i1 to i32
    %c0_i32_33 = arith.constant 0 : i32
    %50 = arith.cmpi ne, %49, %c0_i32_33 : i32
    scf.if %50 {
      %c0_34 = arith.constant 0 : index
      %c0_35 = arith.constant 0 : index
      %51 = vector.load %arg9[%c0_34, %c0_35] : memref<128x1xf32, #tpu.memory_space<vmem>>, vector<128x1xf32>
      %cst_36 = arith.constant 0.000000e+00 : f32
      %52 = vector.broadcast %cst_36 : f32 to vector<128x1xf32>
      %53 = arith.cmpf oeq, %51, %52 : vector<128x1xf32>
      %cst_37 = arith.constant 1.000000e+00 : f32
      %54 = vector.broadcast %cst_37 : f32 to vector<128x1xf32>
      %55 = arith.select %53, %54, %51 : vector<128x1xi1>, vector<128x1xf32>
      %c0_38 = arith.constant 0 : index
      %c0_39 = arith.constant 0 : index
      %56 = vector.load %arg11[%c0_38, %c0_39] : memref<128x1xf32, #tpu.memory_space<vmem>>, vector<128x1xf32>
      %c0_40 = arith.constant 0 : index
      %c0_41 = arith.constant 0 : index
      %57 = vector.load %arg12[%c0_40, %c0_41] : memref<128x1xf32, #tpu.memory_space<vmem>>, vector<128x1xf32>
      %cst_42 = arith.constant 9.99999971E-10 : f32
      %58 = vector.broadcast %cst_42 : f32 to vector<128x1xf32>
      %59 = arith.addf %57, %58 : vector<128x1xf32>
      %60 = math.log %59 : vector<128x1xf32>
      %61 = arith.addf %56, %60 : vector<128x1xf32>
      %62 = arith.mulf %61, %51 : vector<128x1xf32>
      %c0_43 = arith.constant 0 : index
      %c0_44 = arith.constant 0 : index
      %63 = vector.load %arg13[%c0_43, %c0_44] : memref<128x1xf32, #tpu.memory_space<vmem>>, vector<128x1xf32>
      %64 = arith.subf %62, %63 : vector<128x1xf32>
      %65 = arith.divf %64, %55 : vector<128x1xf32>
      %c0_45 = arith.constant 0 : index
      %c0_46 = arith.constant 0 : index
      %66 = vector.load %arg10[%c0_45, %c0_46] : memref<128x1xf32, #tpu.memory_space<vmem>>, vector<128x1xf32>
      tpu.vector_store %arg10[%c0_45, %c0_46], %65 {strides = array<i32>} : memref<128x1xf32, #tpu.memory_space<vmem>>, vector<128x1xf32>,
    } else {
    }
    return
  }
  func.func @transform_0(%arg0: i32, %arg1: i32) -> (i32, i32) {
    %c0_i32 = arith.constant 0 : i32
    %c0_i32_0 = arith.constant 0 : i32
    return %arg0, %c0_i32 : i32, i32
  }
  func.func @transform_1(%arg0: i32, %arg1: i32) -> (i32, i32) {
    %c0_i32 = arith.constant 0 : i32
    %c0_i32_0 = arith.constant 0 : i32
    return %c0_i32, %arg1 : i32, i32
  }
  func.func @transform_2(%arg0: i32, %arg1: i32) -> (i32, i32) {
    %c0_i32 = arith.constant 0 : i32
    %c0_i32_0 = arith.constant 0 : i32
    return %arg0, %c0_i32 : i32, i32
  }
  func.func @transform_3(%arg0: i32, %arg1: i32) -> (i32, i32) {
    %c0_i32 = arith.constant 0 : i32
    %c0_i32_0 = arith.constant 0 : i32
    return %c0_i32, %arg1 : i32, i32
  }
  func.func @transform_4(%arg0: i32, %arg1: i32) -> (i32, i32) {
    %c0_i32 = arith.constant 0 : i32
    %c0_i32_0 = arith.constant 0 : i32
    return %arg0, %c0_i32 : i32, i32
  }
  func.func @transform_5(%arg0: i32, %arg1: i32) -> (i32, i32) {
    %c0_i32 = arith.constant 0 : i32
    %c0_i32_0 = arith.constant 0 : i32
    return %c0_i32, %arg1 : i32, i32
  }
  func.func @transform_6(%arg0: i32, %arg1: i32) -> (i32, i32) {
    %c0_i32 = arith.constant 0 : i32
    %c0_i32_0 = arith.constant 0 : i32
    return %c0_i32, %arg1 : i32, i32
  }
  func.func @transform_7(%arg0: i32, %arg1: i32) -> (i32, i32) {
    %c0_i32 = arith.constant 0 : i32
    %c0_i32_0 = arith.constant 0 : i32
    return %arg0, %c0_i32 : i32, i32
  }
  func.func @transform_8(%arg0: i32, %arg1: i32) -> (i32, i32) {
    %c0_i32 = arith.constant 0 : i32
    %c0_i32_0 = arith.constant 0 : i32
    return %arg0, %c0_i32 : i32, i32
  }
}

</mosaic_0001>

<llo_original>
// kernel: tpu_custom_call.1
$region0: #{tpu_custom_call.1}
  #allocation0 [shape = 'u32[]', space=smem, size = 0x4, offset = 0x4, fixed_abs, tag = 'smem constant byte address 0x4 - core index']
  #allocation1 [shape = 'u32[144,128]{1,0:T(1,128)}', space=vmem, size = 0x12000, scoped, tag = 'internal scratch']
  #allocation2 [shape = 'f32[128,1]{1,0:T(8,128)}', space=vmem, size = 0x10000, scoped, tag = 'scratch operand']
  #allocation3 [shape = 'f32[128,1]{1,0:T(8,128)}', space=vmem, size = 0x10000, scoped, tag = 'scratch operand']
  #allocation4 [shape = 'f32[128,1]{1,0:T(8,128)}', space=vmem, size = 0x10000, scoped, tag = 'scratch operand']
  %s0 = inlined_call_operand.vmem [shape: f32[128,128], index: 0, kind: input, shape index: {}]
  %s1 = inlined_call_operand.vmem [shape: f32[128,128], index: 1, kind: input, shape index: {}]
  %s2 = inlined_call_operand.vmem [shape: s32[128,1], index: 2, kind: input, shape index: {}]
  %s3 = inlined_call_operand.vmem [shape: s32[1,128], index: 3, kind: input, shape index: {}]
  %s4 = inlined_call_operand.vmem [shape: s32[128,1], index: 4, kind: input, shape index: {}]
  %s5 = inlined_call_operand.vmem [shape: s32[1,128], index: 5, kind: input, shape index: {}]
  %s6 = inlined_call_operand.vmem [shape: f32[1,128], index: 6, kind: input, shape index: {}]
  %s7 = inlined_call_operand.vmem [shape: f32[128,1], index: 7, kind: input, shape index: {}]
  %s8 = inlined_call_operand.vmem [shape: f32[128,1], index: 8, kind: output, shape index: {}]
  %s9 = sld [smem:[#allocation0]]
  $region58: #{tpu_custom_call.1} parent=0
    _
  %s11 = ssub.s32 1, %s9
  %s12 = scalar_select 0, %s11, %s9
  // Predicated region
  $region2: #{tpu_custom_call.1} parent=0 // pred_check
    _
  $region3: #{tpu_custom_call.1} parent=0 // pred_check_branch
    %14 = sbr.rel (0) target = $region5
  $region4: #{tpu_custom_call.1} parent=0 // pred_region
    _
  $region5: #{tpu_custom_call.1} parent=0 // pred_fallthru
    _
  // Predicated region
  $region6: #{tpu_custom_call.1} parent=0 // pred_check
    _
  $region7: #{tpu_custom_call.1} parent=0 // pred_check_branch
    %16 = sbr.rel (0) target = $region9
  $region8: #{tpu_custom_call.1} parent=0 // pred_region
    _
  $region9: #{tpu_custom_call.1} parent=0 // pred_fallthru
    _
  // Predicated region
  $region10: #{tpu_custom_call.1} parent=0 // pred_check
    _
  $region11: #{tpu_custom_call.1} parent=0 // pred_check_branch
    %18 = sbr.rel (0) target = $region13
  $region12: #{tpu_custom_call.1} parent=0 // pred_region
    _
  $region13: #{tpu_custom_call.1} parent=0 // pred_fallthru
    _
  // Predicated region
  $region14: #{tpu_custom_call.1} parent=0 // pred_check
    _
  $region15: #{tpu_custom_call.1} parent=0 // pred_check_branch
    %20 = sbr.rel (0) target = $region17
  $region16: #{tpu_custom_call.1} parent=0 // pred_region
    _
  $region17: #{tpu_custom_call.1} parent=0 // pred_fallthru
    _
  // Predicated region
  $region18: #{tpu_custom_call.1} parent=0 // pred_check
    _
  $region19: #{tpu_custom_call.1} parent=0 // pred_check_branch
    %22 = sbr.rel (0) target = $region21
  $region20: #{tpu_custom_call.1} parent=0 // pred_region
    _
  $region21: #{tpu_custom_call.1} parent=0 // pred_fallthru
    _
  // Predicated region
  $region22: #{tpu_custom_call.1} parent=0 // pred_check
    _
  $region23: #{tpu_custom_call.1} parent=0 // pred_check_branch
    %24 = sbr.rel (0) target = $region25
  $region24: #{tpu_custom_call.1} parent=0 // pred_region
    _
  $region25: #{tpu_custom_call.1} parent=0 // pred_fallthru
    _
  // Predicated region
  $region26: #{tpu_custom_call.1} parent=0 // pred_check
    _
  $region27: #{tpu_custom_call.1} parent=0 // pred_check_branch
    %26 = sbr.rel (0) target = $region29
  $region28: #{tpu_custom_call.1} parent=0 // pred_region
    _
  $region29: #{tpu_custom_call.1} parent=0 // pred_fallthru
    _
  // Predicated region
  $region30: #{tpu_custom_call.1} parent=0 // pred_check
    _
  $region31: #{tpu_custom_call.1} parent=0 // pred_check_branch
    %28 = sbr.rel (0) target = $region33
  $region32: #{tpu_custom_call.1} parent=0 // pred_region
    _
  $region33: #{tpu_custom_call.1} parent=0 // pred_fallthru
    _
  %p29 = scmp.eq.s32.totalorder 0, 0
  // Predicated region
  $region34: #{tpu_custom_call.1} parent=0 // pred_check
    %p30 = pneg %p29
  $region35: #{tpu_custom_call.1} parent=0 // pred_check_branch
    %32 = sbr.rel (%p30) target = $region37
  $region36: #{tpu_custom_call.1} parent=0 // pred_region
    %vm33 = vcmask 7168
    %34 = vst.msk [vmem:[#allocation2] sm:$0xff] %vm33, -1e+30
    %35 = vst.msk [vmem:[#allocation2 + $0x8] sm:$0xff] %vm33, -1e+30
    %36 = vst.msk [vmem:[#allocation2 + $0x10] sm:$0xff] %vm33, -1e+30
    %37 = vst.msk [vmem:[#allocation2 + $0x18] sm:$0xff] %vm33, -1e+30
    %38 = vst.msk [vmem:[#allocation2 + $0x20] sm:$0xff] %vm33, -1e+30
    %39 = vst.msk [vmem:[#allocation2 + $0x28] sm:$0xff] %vm33, -1e+30
    %40 = vst.msk [vmem:[#allocation2 + $0x30] sm:$0xff] %vm33, -1e+30
    %41 = vst.msk [vmem:[#allocation2 + $0x38] sm:$0xff] %vm33, -1e+30
    %42 = vst.msk [vmem:[#allocation2 + $0x40] sm:$0xff] %vm33, -1e+30
    %43 = vst.msk [vmem:[#allocation2 + $0x48] sm:$0xff] %vm33, -1e+30
    %44 = vst.msk [vmem:[#allocation2 + $0x50] sm:$0xff] %vm33, -1e+30
    %45 = vst.msk [vmem:[#allocation2 + $0x58] sm:$0xff] %vm33, -1e+30
    %46 = vst.msk [vmem:[#allocation2 + $0x60] sm:$0xff] %vm33, -1e+30
    %47 = vst.msk [vmem:[#allocation2 + $0x68] sm:$0xff] %vm33, -1e+30
    %48 = vst.msk [vmem:[#allocation2 + $0x70] sm:$0xff] %vm33, -1e+30
    %49 = vst.msk [vmem:[#allocation2 + $0x78] sm:$0xff] %vm33, -1e+30
    %50 = vst.msk [vmem:[#allocation3] sm:$0xff] %vm33, 0.0
    %51 = vst.msk [vmem:[#allocation3 + $0x8] sm:$0xff] %vm33, 0.0
    %52 = vst.msk [vmem:[#allocation3 + $0x10] sm:$0xff] %vm33, 0.0
    %53 = vst.msk [vmem:[#allocation3 + $0x18] sm:$0xff] %vm33, 0.0
    %54 = vst.msk [vmem:[#allocation3 + $0x20] sm:$0xff] %vm33, 0.0
    %55 = vst.msk [vmem:[#allocation3 + $0x28] sm:$0xff] %vm33, 0.0
    %56 = vst.msk [vmem:[#allocation3 + $0x30] sm:$0xff] %vm33, 0.0
    %57 = vst.msk [vmem:[#allocation3 + $0x38] sm:$0xff] %vm33, 0.0
    %58 = vst.msk [vmem:[#allocation3 + $0x40] sm:$0xff] %vm33, 0.0
    %59 = vst.msk [vmem:[#allocation3 + $0x48] sm:$0xff] %vm33, 0.0
    %60 = vst.msk [vmem:[#allocation3 + $0x50] sm:$0xff] %vm33, 0.0
    %61 = vst.msk [vmem:[#allocation3 + $0x58] sm:$0xff] %vm33, 0.0
    %62 = vst.msk [vmem:[#allocation3 + $0x60] sm:$0xff] %vm33, 0.0
    %63 = vst.msk [vmem:[#allocation3 + $0x68] sm:$0xff] %vm33, 0.0
    %64 = vst.msk [vmem:[#allocation3 + $0x70] sm:$0xff] %vm33, 0.0
    %65 = vst.msk [vmem:[#allocation3 + $0x78] sm:$0xff] %vm33, 0.0
    %66 = vst.msk [vmem:[#allocation4] sm:$0xff] %vm33, 0.0
    %67 = vst.msk [vmem:[#allocation4 + $0x8] sm:$0xff] %vm33, 0.0
    %68 = vst.msk [vmem:[#allocation4 + $0x10] sm:$0xff] %vm33, 0.0
    %69 = vst.msk [vmem:[#allocation4 + $0x18] sm:$0xff] %vm33, 0.0
    %70 = vst.msk [vmem:[#allocation4 + $0x20] sm:$0xff] %vm33, 0.0
    %71 = vst.msk [vmem:[#allocation4 + $0x28] sm:$0xff] %vm33, 0.0
    %72 = vst.msk [vmem:[#allocation4 + $0x30] sm:$0xff] %vm33, 0.0
    %73 = vst.msk [vmem:[#allocation4 + $0x38] sm:$0xff] %vm33, 0.0
    %74 = vst.msk [vmem:[#allocation4 + $0x40] sm:$0xff] %vm33, 0.0
    %75 = vst.msk [vmem:[#allocation4 + $0x48] sm:$0xff] %vm33, 0.0
    %76 = vst.msk [vmem:[#allocation4 + $0x50] sm:$0xff] %vm33, 0.0
    %77 = vst.msk [vmem:[#allocation4 + $0x58] sm:$0xff] %vm33, 0.0
    %78 = vst.msk [vmem:[#allocation4 + $0x60] sm:$0xff] %vm33, 0.0
    %79 = vst.msk [vmem:[#allocation4 + $0x68] sm:$0xff] %vm33, 0.0
    %80 = vst.msk [vmem:[#allocation4 + $0x70] sm:$0xff] %vm33, 0.0
    %81 = vst.msk [vmem:[#allocation4 + $0x78] sm:$0xff] %vm33, 0.0
  $region37: #{tpu_custom_call.1} parent=0 // pred_fallthru
    _
  %v82 = vld [vmem:[%s0] sm:$0xff]
  %v83 = vld [vmem:[%s0 + $0x8] sm:$0xff]
  %v84 = vld [vmem:[%s0 + $0x10] sm:$0xff]
  %v85 = vld [vmem:[%s0 + $0x18] sm:$0xff]
  %v86 = vld [vmem:[%s0 + $0x20] sm:$0xff]
  %v87 = vld [vmem:[%s0 + $0x28] sm:$0xff]
  %v88 = vld [vmem:[%s0 + $0x30] sm:$0xff]
  %v89 = vld [vmem:[%s0 + $0x38] sm:$0xff]
  %v90 = vld [vmem:[%s0 + $0x40] sm:$0xff]
  %v91 = vld [vmem:[%s0 + $0x48] sm:$0xff]
  %v92 = vld [vmem:[%s0 + $0x50] sm:$0xff]
  %v93 = vld [vmem:[%s0 + $0x58] sm:$0xff]
  %v94 = vld [vmem:[%s0 + $0x60] sm:$0xff]
  %v95 = vld [vmem:[%s0 + $0x68] sm:$0xff]
  %v96 = vld [vmem:[%s0 + $0x70] sm:$0xff]
  %v97 = vld [vmem:[%s0 + $0x78] sm:$0xff]
  %v98 = vld [vmem:[%s1] sm:$0xff]
  %v99 = vld [vmem:[%s1 + $0x8] sm:$0xff]
  %v100 = vld [vmem:[%s1 + $0x10] sm:$0xff]
  %v101 = vld [vmem:[%s1 + $0x18] sm:$0xff]
  %v102 = vld [vmem:[%s1 + $0x20] sm:$0xff]
  %v103 = vld [vmem:[%s1 + $0x28] sm:$0xff]
  %v104 = vld [vmem:[%s1 + $0x30] sm:$0xff]
  %v105 = vld [vmem:[%s1 + $0x38] sm:$0xff]
  %v106 = vld [vmem:[%s1 + $0x40] sm:$0xff]
  %v107 = vld [vmem:[%s1 + $0x48] sm:$0xff]
  %v108 = vld [vmem:[%s1 + $0x50] sm:$0xff]
  %v109 = vld [vmem:[%s1 + $0x58] sm:$0xff]
  %v110 = vld [vmem:[%s1 + $0x60] sm:$0xff]
  %v111 = vld [vmem:[%s1 + $0x68] sm:$0xff]
  %v112 = vld [vmem:[%s1 + $0x70] sm:$0xff]
  %v113 = vld [vmem:[%s1 + $0x78] sm:$0xff]
  %114 = vmatprep.subr.mxu0 0.0
  %115 = vmatpush1.msra.mxu0 %v98
  %116 = vmatprep.subr.mxu0 0.0
  %117 = vmatpush1.msra.mxu0 %v99
  %118 = vmatprep.subr.mxu0 0.0
  %119 = vmatpush1.msra.mxu0 %v100
  %120 = vmatprep.subr.mxu0 0.0
  %121 = vmatpush1.msra.mxu0 %v101
  %122 = vmatprep.subr.mxu0 0.0
  %123 = vmatpush1.msra.mxu0 %v102
  %124 = vmatprep.subr.mxu0 0.0
  %125 = vmatpush1.msra.mxu0 %v103
  %126 = vmatprep.subr.mxu0 0.0
  %127 = vmatpush1.msra.mxu0 %v104
  %128 = vmatprep.subr.mxu0 0.0
  %129 = vmatpush1.msra.mxu0 %v105
  %130 = vmatprep.subr.mxu0 0.0
  %131 = vmatpush1.msra.mxu0 %v106
  %132 = vmatprep.subr.mxu0 0.0
  %133 = vmatpush1.msra.mxu0 %v107
  %134 = vmatprep.subr.mxu0 0.0
  %135 = vmatpush1.msra.mxu0 %v108
  %136 = vmatprep.subr.mxu0 0.0
  %137 = vmatpush1.msra.mxu0 %v109
  %138 = vmatprep.subr.mxu0 0.0
  %139 = vmatpush1.msra.mxu0 %v110
  %140 = vmatprep.subr.mxu0 0.0
  %141 = vmatpush1.msra.mxu0 %v111
  %142 = vmatprep.subr.mxu0 0.0
  %143 = vmatpush1.msra.mxu0 %v112
  %144 = vmatprep.subr.mxu0 0.0
  %145 = vmatpush1.msra.mxu0 %v113
  %146 = vmatprep.subr.mxu0 0.0
  %147 = vmatpush1.msra.mxu0 0.0
  %148 = vmatprep.subr.mxu0 0.0
  %149 = vmatpush1.msra.mxu0 0.0
  %150 = vmatprep.subr.mxu0 0.0
  %151 = vmatpush1.msra.mxu0 0.0
  %152 = vmatprep.subr.mxu0 0.0
  %153 = vmatpush1.msra.mxu0 0.0
  %154 = vmatprep.subr.mxu0 0.0
  %155 = vmatpush1.msra.mxu0 0.0
  %156 = vmatprep.subr.mxu0 0.0
  %157 = vmatpush1.msra.mxu0 0.0
  %158 = vmatprep.subr.mxu0 0.0
  %159 = vmatpush1.msra.mxu0 0.0
  %160 = vmatprep.subr.mxu0 0.0
  %161 = vmatpush1.msra.mxu0 0.0
  %162 = vmatprep.subr.mxu0 0.0
  %163 = vmatpush1.msra.mxu0 0.0
  %164 = vmatprep.subr.mxu0 0.0
  %165 = vmatpush1.msra.mxu0 0.0
  %166 = vmatprep.subr.mxu0 0.0
  %167 = vmatpush1.msra.mxu0 0.0
  %168 = vmatprep.subr.mxu0 0.0
  %169 = vmatpush1.msra.mxu0 0.0
  %170 = vmatprep.subr.mxu0 0.0
  %171 = vmatpush1.msra.mxu0 0.0
  %172 = vmatprep.subr.mxu0 0.0
  %173 = vmatpush1.msra.mxu0 0.0
  %174 = vmatprep.subr.mxu0 0.0
  %175 = vmatpush1.msra.mxu0 0.0
  %176 = vmatprep.subr.mxu0 0.0
  %177 = vmatpush1.msra.mxu0 0.0
  %178 = vmatprep.mubr.f32.mxu0 0.0
  %179 = vmatmul.mubr.f32.gmra.mrb[0].mxu0 %v82
  %v180 = vpop.f32.mrb[0].mxu0
  %v181 = vadd.f32 0.0, %v180
  %v182 = vpop.f32.mrb[0].mxu0
  %183 = vmatprep.mubr.f32.mxu0 0.0
  %184 = vmatmul.mubr.f32.gmra.mrb[0].mxu0 %v83
  %v185 = vpop.f32.mrb[0].mxu0
  %v186 = vadd.f32 0.0, %v185
  %v187 = vpop.f32.mrb[0].mxu0
  %188 = vmatprep.mubr.f32.mxu0 0.0
  %189 = vmatmul.mubr.f32.gmra.mrb[0].mxu0 %v84
  %v190 = vpop.f32.mrb[0].mxu0
  %v191 = vadd.f32 0.0, %v190
  %v192 = vpop.f32.mrb[0].mxu0
  %193 = vmatprep.mubr.f32.mxu0 0.0
  %194 = vmatmul.mubr.f32.gmra.mrb[0].mxu0 %v85
  %v195 = vpop.f32.mrb[0].mxu0
  %v196 = vadd.f32 0.0, %v195
  %v197 = vpop.f32.mrb[0].mxu0
  %198 = vmatprep.mubr.f32.mxu0 0.0
  %199 = vmatmul.mubr.f32.gmra.mrb[0].mxu0 %v86
  %v200 = vpop.f32.mrb[0].mxu0
  %v201 = vadd.f32 0.0, %v200
  %v202 = vpop.f32.mrb[0].mxu0
  %203 = vmatprep.mubr.f32.mxu0 0.0
  %204 = vmatmul.mubr.f32.gmra.mrb[0].mxu0 %v87
  %v205 = vpop.f32.mrb[0].mxu0
  %v206 = vadd.f32 0.0, %v205
  %v207 = vpop.f32.mrb[0].mxu0
  %208 = vmatprep.mubr.f32.mxu0 0.0
  %209 = vmatmul.mubr.f32.gmra.mrb[0].mxu0 %v88
  %v210 = vpop.f32.mrb[0].mxu0
  %v211 = vadd.f32 0.0, %v210
  %v212 = vpop.f32.mrb[0].mxu0
  %213 = vmatprep.mubr.f32.mxu0 0.0
  %214 = vmatmul.mubr.f32.gmra.mrb[0].mxu0 %v89
  %v215 = vpop.f32.mrb[0].mxu0
  %v216 = vadd.f32 0.0, %v215
  %v217 = vpop.f32.mrb[0].mxu0
  %218 = vmatprep.mubr.f32.mxu0 0.0
  %219 = vmatmul.mubr.f32.gmra.mrb[0].mxu0 %v90
  %v220 = vpop.f32.mrb[0].mxu0
  %v221 = vadd.f32 0.0, %v220
  %v222 = vpop.f32.mrb[0].mxu0
  %223 = vmatprep.mubr.f32.mxu0 0.0
  %224 = vmatmul.mubr.f32.gmra.mrb[0].mxu0 %v91
  %v225 = vpop.f32.mrb[0].mxu0
  %v226 = vadd.f32 0.0, %v225
  %v227 = vpop.f32.mrb[0].mxu0
  %228 = vmatprep.mubr.f32.mxu0 0.0
  %229 = vmatmul.mubr.f32.gmra.mrb[0].mxu0 %v92
  %v230 = vpop.f32.mrb[0].mxu0
  %v231 = vadd.f32 0.0, %v230
  %v232 = vpop.f32.mrb[0].mxu0
  %233 = vmatprep.mubr.f32.mxu0 0.0
  %234 = vmatmul.mubr.f32.gmra.mrb[0].mxu0 %v93
  %v235 = vpop.f32.mrb[0].mxu0
  %v236 = vadd.f32 0.0, %v235
  %v237 = vpop.f32.mrb[0].mxu0
  %238 = vmatprep.mubr.f32.mxu0 0.0
  %239 = vmatmul.mubr.f32.gmra.mrb[0].mxu0 %v94
  %v240 = vpop.f32.mrb[0].mxu0
  %v241 = vadd.f32 0.0, %v240
  %v242 = vpop.f32.mrb[0].mxu0
  %243 = vmatprep.mubr.f32.mxu0 0.0
  %244 = vmatmul.mubr.f32.gmra.mrb[0].mxu0 %v95
  %v245 = vpop.f32.mrb[0].mxu0
  %v246 = vadd.f32 0.0, %v245
  %v247 = vpop.f32.mrb[0].mxu0
  %248 = vmatprep.mubr.f32.mxu0 0.0
  %249 = vmatmul.mubr.f32.gmra.mrb[0].mxu0 %v96
  %v250 = vpop.f32.mrb[0].mxu0
  %v251 = vadd.f32 0.0, %v250
  %v252 = vpop.f32.mrb[0].mxu0
  %253 = vmatprep.mubr.f32.mxu0 0.0
  %254 = vmatmul.mubr.f32.gmra.mrb[0].mxu0 %v97
  %v255 = vpop.f32.mrb[0].mxu0
  %v256 = vadd.f32 0.0, %v255
  %v257 = vpop.f32.mrb[0].mxu0
  %258 = vdwg.mxu0
  %v259 = vld [vmem:[%s6] sm:$0x1]
  %v261 = vlaneseq
  %v262 = vshrl.u32 %v261, 7
  %v263 = vsub.s32 0, %v262
  %v264 = vrot.slane %v259, %v263
  %v266 = vadd.f32 %v181, %v264
  %v267 = vadd.f32 %v186, %v264
  %v268 = vadd.f32 %v191, %v264
  %v269 = vadd.f32 %v196, %v264
  %v270 = vadd.f32 %v201, %v264
  %v271 = vadd.f32 %v206, %v264
  %v272 = vadd.f32 %v211, %v264
  %v273 = vadd.f32 %v216, %v264
  %v274 = vadd.f32 %v221, %v264
  %v275 = vadd.f32 %v226, %v264
  %v276 = vadd.f32 %v231, %v264
  %v277 = vadd.f32 %v236, %v264
  %v278 = vadd.f32 %v241, %v264
  %v279 = vadd.f32 %v246, %v264
  %v280 = vadd.f32 %v251, %v264
  %v281 = vadd.f32 %v256, %v264
  %v282 = vld [vmem:[#allocation2] sm:$0xff]
  %v283 = vld [vmem:[#allocation2 + $0x8] sm:$0xff]
  %v284 = vld [vmem:[#allocation2 + $0x10] sm:$0xff]
  %v285 = vld [vmem:[#allocation2 + $0x18] sm:$0xff]
  %v286 = vld [vmem:[#allocation2 + $0x20] sm:$0xff]
  %v287 = vld [vmem:[#allocation2 + $0x28] sm:$0xff]
  %v288 = vld [vmem:[#allocation2 + $0x30] sm:$0xff]
  %v289 = vld [vmem:[#allocation2 + $0x38] sm:$0xff]
  %v290 = vld [vmem:[#allocation2 + $0x40] sm:$0xff]
  %v291 = vld [vmem:[#allocation2 + $0x48] sm:$0xff]
  %v292 = vld [vmem:[#allocation2 + $0x50] sm:$0xff]
  %v293 = vld [vmem:[#allocation2 + $0x58] sm:$0xff]
  %v294 = vld [vmem:[#allocation2 + $0x60] sm:$0xff]
  %v295 = vld [vmem:[#allocation2 + $0x68] sm:$0xff]
  %v296 = vld [vmem:[#allocation2 + $0x70] sm:$0xff]
  %v297 = vld [vmem:[#allocation2 + $0x78] sm:$0xff]
  %298 = vmax.xlane.f32.xlu0 %v266
  %v299 = vpop.xlane.xlu0 %298
  %300 = vmax.xlane.f32.xlu0 %v267
  %v301 = vpop.xlane.xlu0 %300
  %302 = vmax.xlane.f32.xlu0 %v268
  %v303 = vpop.xlane.xlu0 %302
  %304 = vmax.xlane.f32.xlu0 %v269
  %v305 = vpop.xlane.xlu0 %304
  %306 = vmax.xlane.f32.xlu0 %v270
  %v307 = vpop.xlane.xlu0 %306
  %308 = vmax.xlane.f32.xlu0 %v271
  %v309 = vpop.xlane.xlu0 %308
  %310 = vmax.xlane.f32.xlu0 %v272
  %v311 = vpop.xlane.xlu0 %310
  %312 = vmax.xlane.f32.xlu0 %v273
  %v313 = vpop.xlane.xlu0 %312
  %314 = vmax.xlane.f32.xlu0 %v274
  %v315 = vpop.xlane.xlu0 %314
  %316 = vmax.xlane.f32.xlu0 %v275
  %v317 = vpop.xlane.xlu0 %316
  %318 = vmax.xlane.f32.xlu0 %v276
  %v319 = vpop.xlane.xlu0 %318
  %320 = vmax.xlane.f32.xlu0 %v277
  %v321 = vpop.xlane.xlu0 %320
  %322 = vmax.xlane.f32.xlu0 %v278
  %v323 = vpop.xlane.xlu0 %322
  %324 = vmax.xlane.f32.xlu0 %v279
  %v325 = vpop.xlane.xlu0 %324
  %326 = vmax.xlane.f32.xlu0 %v280
  %v327 = vpop.xlane.xlu0 %326
  %328 = vmax.xlane.f32.xlu0 %v281
  %v329 = vpop.xlane.xlu0 %328
  %v330 = vmax.f32 %v282, %v299
  %v331 = vmax.f32 %v283, %v301
  %v332 = vmax.f32 %v284, %v303
  %v333 = vmax.f32 %v285, %v305
  %v334 = vmax.f32 %v286, %v307
  %v335 = vmax.f32 %v287, %v309
  %v336 = vmax.f32 %v288, %v311
  %v337 = vmax.f32 %v289, %v313
  %v338 = vmax.f32 %v290, %v315
  %v339 = vmax.f32 %v291, %v317
  %v340 = vmax.f32 %v292, %v319
  %v341 = vmax.f32 %v293, %v321
  %v342 = vmax.f32 %v294, %v323
  %v343 = vmax.f32 %v295, %v325
  %v344 = vmax.f32 %v296, %v327
  %v345 = vmax.f32 %v297, %v329
  %v346 = vsub.f32 %v282, %v330
  %v347 = vsub.f32 %v283, %v331
  %v348 = vsub.f32 %v284, %v332
  %v349 = vsub.f32 %v285, %v333
  %v350 = vsub.f32 %v286, %v334
  %v351 = vsub.f32 %v287, %v335
  %v352 = vsub.f32 %v288, %v336
  %v353 = vsub.f32 %v289, %v337
  %v354 = vsub.f32 %v290, %v338
  %v355 = vsub.f32 %v291, %v339
  %v356 = vsub.f32 %v292, %v340
  %v357 = vsub.f32 %v293, %v341
  %v358 = vsub.f32 %v294, %v342
  %v359 = vsub.f32 %v295, %v343
  %v360 = vsub.f32 %v296, %v344
  %v361 = vsub.f32 %v297, %v345
  %v362 = vmul.f32 %v346, 1.442695
  %v363 = vpow.pop %v362
  %v364 = vmul.f32 %v347, 1.442695
  %v365 = vpow.pop %v364
  %v366 = vmul.f32 %v348, 1.442695
  %v367 = vpow.pop %v366
  %v368 = vmul.f32 %v349, 1.442695
  %v369 = vpow.pop %v368
  %v370 = vmul.f32 %v350, 1.442695
  %v371 = vpow.pop %v370
  %v372 = vmul.f32 %v351, 1.442695
  %v373 = vpow.pop %v372
  %v374 = vmul.f32 %v352, 1.442695
  %v375 = vpow.pop %v374
  %v376 = vmul.f32 %v353, 1.442695
  %v377 = vpow.pop %v376
  %v378 = vmul.f32 %v354, 1.442695
  %v379 = vpow.pop %v378
  %v380 = vmul.f32 %v355, 1.442695
  %v381 = vpow.pop %v380
  %v382 = vmul.f32 %v356, 1.442695
  %v383 = vpow.pop %v382
  %v384 = vmul.f32 %v357, 1.442695
  %v385 = vpow.pop %v384
  %v386 = vmul.f32 %v358, 1.442695
  %v387 = vpow.pop %v386
  %v388 = vmul.f32 %v359, 1.442695
  %v389 = vpow.pop %v388
  %v390 = vmul.f32 %v360, 1.442695
  %v391 = vpow.pop %v390
  %v392 = vmul.f32 %v361, 1.442695
  %v393 = vpow.pop %v392
  %vm394 = vcmask 7168
  %395 = vst.msk [vmem:[#allocation2] sm:$0xff] %vm394, %v330
  %396 = vst.msk [vmem:[#allocation2 + $0x8] sm:$0xff] %vm394, %v331
  %397 = vst.msk [vmem:[#allocation2 + $0x10] sm:$0xff] %vm394, %v332
  %398 = vst.msk [vmem:[#allocation2 + $0x18] sm:$0xff] %vm394, %v333
  %399 = vst.msk [vmem:[#allocation2 + $0x20] sm:$0xff] %vm394, %v334
  %400 = vst.msk [vmem:[#allocation2 + $0x28] sm:$0xff] %vm394, %v335
  %401 = vst.msk [vmem:[#allocation2 + $0x30] sm:$0xff] %vm394, %v336
  %402 = vst.msk [vmem:[#allocation2 + $0x38] sm:$0xff] %vm394, %v337
  %403 = vst.msk [vmem:[#allocation2 + $0x40] sm:$0xff] %vm394, %v338
  %404 = vst.msk [vmem:[#allocation2 + $0x48] sm:$0xff] %vm394, %v339
  %405 = vst.msk [vmem:[#allocation2 + $0x50] sm:$0xff] %vm394, %v340
  %406 = vst.msk [vmem:[#allocation2 + $0x58] sm:$0xff] %vm394, %v341
  %407 = vst.msk [vmem:[#allocation2 + $0x60] sm:$0xff] %vm394, %v342
  %408 = vst.msk [vmem:[#allocation2 + $0x68] sm:$0xff] %vm394, %v343
  %409 = vst.msk [vmem:[#allocation2 + $0x70] sm:$0xff] %vm394, %v344
  %410 = vst.msk [vmem:[#allocation2 + $0x78] sm:$0xff] %vm394, %v345
  %s411 = smul.u32 0, 128
  %s412 = smul.u32 0, 128
  %s413 = sadd.s32 %s412, 128
  %p414 = scmp.lt.s32.totalorder %s411, %s413
  %s415 = sadd.s32 %s411, 128
  %p416 = scmp.lt.s32.totalorder %s412, %s415
  %p417 = pnand %p414, %p416
  %p418 = pneg %p417
  // Predicated region
  $region38: #{tpu_custom_call.1} parent=0 // pred_check
    _
  $region39: #{tpu_custom_call.1} parent=0 // pred_check_branch
    %420 = sbr.rel (%p417) target = $region41
  $region40: #{tpu_custom_call.1} parent=0 // pred_region
    %v421 = vlaneseq
    %v422 = vshrl.u32 %v421, 7
    %v423 = vadd.s32 %v422, 8
    %v424 = vadd.s32 %v422, 16
    %v425 = vadd.s32 %v422, 24
    %v426 = vadd.s32 %v422, 32
    %v427 = vadd.s32 %v422, 40
    %v428 = vadd.s32 %v422, 48
    %v429 = vadd.s32 %v422, 56
    %v430 = vadd.s32 %v422, 64
    %v431 = vadd.s32 %v422, 72
    %v432 = vadd.s32 %v422, 80
    %v433 = vadd.s32 %v422, 88
    %v434 = vadd.s32 %v422, 96
    %v435 = vadd.s32 %v422, 104
    %v436 = vadd.s32 %v422, 112
    %v437 = vadd.s32 %v422, 120
    %v438 = vlaneseq
    %v439 = vand.u32 %v438, 127
    %v440 = vsub.s32 %v422, %v439
    %v441 = vsub.s32 %v423, %v439
    %v442 = vsub.s32 %v424, %v439
    %v443 = vsub.s32 %v425, %v439
    %v444 = vsub.s32 %v426, %v439
    %v445 = vsub.s32 %v427, %v439
    %v446 = vsub.s32 %v428, %v439
    %v447 = vsub.s32 %v429, %v439
    %v448 = vsub.s32 %v430, %v439
    %v449 = vsub.s32 %v431, %v439
    %v450 = vsub.s32 %v432, %v439
    %v451 = vsub.s32 %v433, %v439
    %v452 = vsub.s32 %v434, %v439
    %v453 = vsub.s32 %v435, %v439
    %v454 = vsub.s32 %v436, %v439
    %v455 = vsub.s32 %v437, %v439
    %s456 = ssub.s32 %s411, %s412
    %v457 = vstv %s456
    %vm458 = vcmp.eq.s32.totalorder %v440, %v457
    %vm459 = vcmp.eq.s32.totalorder %v441, %v457
    %vm460 = vcmp.eq.s32.totalorder %v442, %v457
    %vm461 = vcmp.eq.s32.totalorder %v443, %v457
    %vm462 = vcmp.eq.s32.totalorder %v444, %v457
    %vm463 = vcmp.eq.s32.totalorder %v445, %v457
    %vm464 = vcmp.eq.s32.totalorder %v446, %v457
    %vm465 = vcmp.eq.s32.totalorder %v447, %v457
    %vm466 = vcmp.eq.s32.totalorder %v448, %v457
    %vm467 = vcmp.eq.s32.totalorder %v449, %v457
    %vm468 = vcmp.eq.s32.totalorder %v450, %v457
    %vm469 = vcmp.eq.s32.totalorder %v451, %v457
    %vm470 = vcmp.eq.s32.totalorder %v452, %v457
    %vm471 = vcmp.eq.s32.totalorder %v453, %v457
    %vm472 = vcmp.eq.s32.totalorder %v454, %v457
    %vm473 = vcmp.eq.s32.totalorder %v455, %v457
    %v474 = vsel %vm458, -1e+30, %v266
    %v475 = vsel %vm459, -1e+30, %v267
    %v476 = vsel %vm460, -1e+30, %v268
    %v477 = vsel %vm461, -1e+30, %v269
    %v478 = vsel %vm462, -1e+30, %v270
    %v479 = vsel %vm463, -1e+30, %v271
    %v480 = vsel %vm464, -1e+30, %v272
    %v481 = vsel %vm465, -1e+30, %v273
    %v482 = vsel %vm466, -1e+30, %v274
    %v483 = vsel %vm467, -1e+30, %v275
    %v484 = vsel %vm468, -1e+30, %v276
    %v485 = vsel %vm469, -1e+30, %v277
    %v486 = vsel %vm470, -1e+30, %v278
    %v487 = vsel %vm471, -1e+30, %v279
    %v488 = vsel %vm472, -1e+30, %v280
    %v489 = vsel %vm473, -1e+30, %v281
    %491 = vset.pattern.permute.xlu0 0
    %492 = vperm.xlu0 %491, %v330
    %v493 = vpop.permute.xlu0 %492
    %496 = vset.pattern.permute.xlu0 0
    %497 = vperm.xlu0 %496, %v331
    %v498 = vpop.permute.xlu0 %497
    %501 = vset.pattern.permute.xlu0 0
    %502 = vperm.xlu0 %501, %v332
    %v503 = vpop.permute.xlu0 %502
    %506 = vset.pattern.permute.xlu0 0
    %507 = vperm.xlu0 %506, %v333
    %v508 = vpop.permute.xlu0 %507
    %511 = vset.pattern.permute.xlu0 0
    %512 = vperm.xlu0 %511, %v334
    %v513 = vpop.permute.xlu0 %512
    %516 = vset.pattern.permute.xlu0 0
    %517 = vperm.xlu0 %516, %v335
    %v518 = vpop.permute.xlu0 %517
    %521 = vset.pattern.permute.xlu0 0
    %522 = vperm.xlu0 %521, %v336
    %v523 = vpop.permute.xlu0 %522
    %526 = vset.pattern.permute.xlu0 0
    %527 = vperm.xlu0 %526, %v337
    %v528 = vpop.permute.xlu0 %527
    %531 = vset.pattern.permute.xlu0 0
    %532 = vperm.xlu0 %531, %v338
    %v533 = vpop.permute.xlu0 %532
    %536 = vset.pattern.permute.xlu0 0
    %537 = vperm.xlu0 %536, %v339
    %v538 = vpop.permute.xlu0 %537
    %541 = vset.pattern.permute.xlu0 0
    %542 = vperm.xlu0 %541, %v340
    %v543 = vpop.permute.xlu0 %542
    %546 = vset.pattern.permute.xlu0 0
    %547 = vperm.xlu0 %546, %v341
    %v548 = vpop.permute.xlu0 %547
    %551 = vset.pattern.permute.xlu0 0
    %552 = vperm.xlu0 %551, %v342
    %v553 = vpop.permute.xlu0 %552
    %556 = vset.pattern.permute.xlu0 0
    %557 = vperm.xlu0 %556, %v343
    %v558 = vpop.permute.xlu0 %557
    %561 = vset.pattern.permute.xlu0 0
    %562 = vperm.xlu0 %561, %v344
    %v563 = vpop.permute.xlu0 %562
    %566 = vset.pattern.permute.xlu0 0
    %567 = vperm.xlu0 %566, %v345
    %v568 = vpop.permute.xlu0 %567
    %v570 = vsub.f32 %v474, %v493
    %v571 = vsub.f32 %v475, %v498
    %v572 = vsub.f32 %v476, %v503
    %v573 = vsub.f32 %v477, %v508
    %v574 = vsub.f32 %v478, %v513
    %v575 = vsub.f32 %v479, %v518
    %v576 = vsub.f32 %v480, %v523
    %v577 = vsub.f32 %v481, %v528
    %v578 = vsub.f32 %v482, %v533
    %v579 = vsub.f32 %v483, %v538
    %v580 = vsub.f32 %v484, %v543
    %v581 = vsub.f32 %v485, %v548
    %v582 = vsub.f32 %v486, %v553
    %v583 = vsub.f32 %v487, %v558
    %v584 = vsub.f32 %v488, %v563
    %v585 = vsub.f32 %v489, %v568
    %v586 = vmul.f32 %v570, 1.442695
    %v587 = vpow.pop %v586
    %v588 = vmul.f32 %v571, 1.442695
    %v589 = vpow.pop %v588
    %v590 = vmul.f32 %v572, 1.442695
    %v591 = vpow.pop %v590
    %v592 = vmul.f32 %v573, 1.442695
    %v593 = vpow.pop %v592
    %v594 = vmul.f32 %v574, 1.442695
    %v595 = vpow.pop %v594
    %v596 = vmul.f32 %v575, 1.442695
    %v597 = vpow.pop %v596
    %v598 = vmul.f32 %v576, 1.442695
    %v599 = vpow.pop %v598
    %v600 = vmul.f32 %v577, 1.442695
    %v601 = vpow.pop %v600
    %v602 = vmul.f32 %v578, 1.442695
    %v603 = vpow.pop %v602
    %v604 = vmul.f32 %v579, 1.442695
    %v605 = vpow.pop %v604
    %v606 = vmul.f32 %v580, 1.442695
    %v607 = vpow.pop %v606
    %v608 = vmul.f32 %v581, 1.442695
    %v609 = vpow.pop %v608
    %v610 = vmul.f32 %v582, 1.442695
    %v611 = vpow.pop %v610
    %v612 = vmul.f32 %v583, 1.442695
    %v613 = vpow.pop %v612
    %v614 = vmul.f32 %v584, 1.442695
    %v615 = vpow.pop %v614
    %v616 = vmul.f32 %v585, 1.442695
    %v617 = vpow.pop %v616
    %v618 = vld [vmem:[#allocation3] sm:$0xff]
    %v619 = vld [vmem:[#allocation3 + $0x8] sm:$0xff]
    %v620 = vld [vmem:[#allocation3 + $0x10] sm:$0xff]
    %v621 = vld [vmem:[#allocation3 + $0x18] sm:$0xff]
    %v622 = vld [vmem:[#allocation3 + $0x20] sm:$0xff]
    %v623 = vld [vmem:[#allocation3 + $0x28] sm:$0xff]
    %v624 = vld [vmem:[#allocation3 + $0x30] sm:$0xff]
    %v625 = vld [vmem:[#allocation3 + $0x38] sm:$0xff]
    %v626 = vld [vmem:[#allocation3 + $0x40] sm:$0xff]
    %v627 = vld [vmem:[#allocation3 + $0x48] sm:$0xff]
    %v628 = vld [vmem:[#allocation3 + $0x50] sm:$0xff]
    %v629 = vld [vmem:[#allocation3 + $0x58] sm:$0xff]
    %v630 = vld [vmem:[#allocation3 + $0x60] sm:$0xff]
    %v631 = vld [vmem:[#allocation3 + $0x68] sm:$0xff]
    %v632 = vld [vmem:[#allocation3 + $0x70] sm:$0xff]
    %v633 = vld [vmem:[#allocation3 + $0x78] sm:$0xff]
    %v634 = vmul.f32 %v363, %v618
    %v635 = vmul.f32 %v365, %v619
    %v636 = vmul.f32 %v367, %v620
    %v637 = vmul.f32 %v369, %v621
    %v638 = vmul.f32 %v371, %v622
    %v639 = vmul.f32 %v373, %v623
    %v640 = vmul.f32 %v375, %v624
    %v641 = vmul.f32 %v377, %v625
    %v642 = vmul.f32 %v379, %v626
    %v643 = vmul.f32 %v381, %v627
    %v644 = vmul.f32 %v383, %v628
    %v645 = vmul.f32 %v385, %v629
    %v646 = vmul.f32 %v387, %v630
    %v647 = vmul.f32 %v389, %v631
    %v648 = vmul.f32 %v391, %v632
    %v649 = vmul.f32 %v393, %v633
    %650 = vadd.xlane.f32.xlu0 %v587
    %v651 = vpop.xlane.xlu0 %650
    %652 = vadd.xlane.f32.xlu0 %v589
    %v653 = vpop.xlane.xlu0 %652
    %654 = vadd.xlane.f32.xlu0 %v591
    %v655 = vpop.xlane.xlu0 %654
    %656 = vadd.xlane.f32.xlu0 %v593
    %v657 = vpop.xlane.xlu0 %656
    %658 = vadd.xlane.f32.xlu0 %v595
    %v659 = vpop.xlane.xlu0 %658
    %660 = vadd.xlane.f32.xlu0 %v597
    %v661 = vpop.xlane.xlu0 %660
    %662 = vadd.xlane.f32.xlu0 %v599
    %v663 = vpop.xlane.xlu0 %662
    %664 = vadd.xlane.f32.xlu0 %v601
    %v665 = vpop.xlane.xlu0 %664
    %666 = vadd.xlane.f32.xlu0 %v603
    %v667 = vpop.xlane.xlu0 %666
    %668 = vadd.xlane.f32.xlu0 %v605
    %v669 = vpop.xlane.xlu0 %668
    %670 = vadd.xlane.f32.xlu0 %v607
    %v671 = vpop.xlane.xlu0 %670
    %672 = vadd.xlane.f32.xlu0 %v609
    %v673 = vpop.xlane.xlu0 %672
    %674 = vadd.xlane.f32.xlu0 %v611
    %v675 = vpop.xlane.xlu0 %674
    %676 = vadd.xlane.f32.xlu0 %v613
    %v677 = vpop.xlane.xlu0 %676
    %678 = vadd.xlane.f32.xlu0 %v615
    %v679 = vpop.xlane.xlu0 %678
    %680 = vadd.xlane.f32.xlu0 %v617
    %v681 = vpop.xlane.xlu0 %680
    %v682 = vadd.f32 %v634, %v651
    %v683 = vadd.f32 %v635, %v653
    %v684 = vadd.f32 %v636, %v655
    %v685 = vadd.f32 %v637, %v657
    %v686 = vadd.f32 %v638, %v659
    %v687 = vadd.f32 %v639, %v661
    %v688 = vadd.f32 %v640, %v663
    %v689 = vadd.f32 %v641, %v665
    %v690 = vadd.f32 %v642, %v667
    %v691 = vadd.f32 %v643, %v669
    %v692 = vadd.f32 %v644, %v671
    %v693 = vadd.f32 %v645, %v673
    %v694 = vadd.f32 %v646, %v675
    %v695 = vadd.f32 %v647, %v677
    %v696 = vadd.f32 %v648, %v679
    %v697 = vadd.f32 %v649, %v681
    %698 = vst.msk [vmem:[#allocation3] sm:$0xff] %vm394, %v682
    %699 = vst.msk [vmem:[#allocation3 + $0x8] sm:$0xff] %vm394, %v683
    %700 = vst.msk [vmem:[#allocation3 + $0x10] sm:$0xff] %vm394, %v684
    %701 = vst.msk [vmem:[#allocation3 + $0x18] sm:$0xff] %vm394, %v685
    %702 = vst.msk [vmem:[#allocation3 + $0x20] sm:$0xff] %vm394, %v686
    %703 = vst.msk [vmem:[#allocation3 + $0x28] sm:$0xff] %vm394, %v687
    %704 = vst.msk [vmem:[#allocation3 + $0x30] sm:$0xff] %vm394, %v688
    %705 = vst.msk [vmem:[#allocation3 + $0x38] sm:$0xff] %vm394, %v689
    %706 = vst.msk [vmem:[#allocation3 + $0x40] sm:$0xff] %vm394, %v690
    %707 = vst.msk [vmem:[#allocation3 + $0x48] sm:$0xff] %vm394, %v691
    %708 = vst.msk [vmem:[#allocation3 + $0x50] sm:$0xff] %vm394, %v692
    %709 = vst.msk [vmem:[#allocation3 + $0x58] sm:$0xff] %vm394, %v693
    %710 = vst.msk [vmem:[#allocation3 + $0x60] sm:$0xff] %vm394, %v694
    %711 = vst.msk [vmem:[#allocation3 + $0x68] sm:$0xff] %vm394, %v695
    %712 = vst.msk [vmem:[#allocation3 + $0x70] sm:$0xff] %vm394, %v696
    %713 = vst.msk [vmem:[#allocation3 + $0x78] sm:$0xff] %vm394, %v697
  $region41: #{tpu_custom_call.1} parent=0 // pred_fallthru
    _
  %p714 = pneg %p418
  // Predicated region
  $region42: #{tpu_custom_call.1} parent=0 // pred_check
    _
  $region43: #{tpu_custom_call.1} parent=0 // pred_check_branch
    %716 = sbr.rel (%p418) target = $region45
  $region44: #{tpu_custom_call.1} parent=0 // pred_region
    %718 = vset.pattern.permute.xlu0 0
    %719 = vperm.xlu0 %718, %v330
    %v720 = vpop.permute.xlu0 %719
    %723 = vset.pattern.permute.xlu0 0
    %724 = vperm.xlu0 %723, %v331
    %v725 = vpop.permute.xlu0 %724
    %728 = vset.pattern.permute.xlu0 0
    %729 = vperm.xlu0 %728, %v332
    %v730 = vpop.permute.xlu0 %729
    %733 = vset.pattern.permute.xlu0 0
    %734 = vperm.xlu0 %733, %v333
    %v735 = vpop.permute.xlu0 %734
    %738 = vset.pattern.permute.xlu0 0
    %739 = vperm.xlu0 %738, %v334
    %v740 = vpop.permute.xlu0 %739
    %743 = vset.pattern.permute.xlu0 0
    %744 = vperm.xlu0 %743, %v335
    %v745 = vpop.permute.xlu0 %744
    %748 = vset.pattern.permute.xlu0 0
    %749 = vperm.xlu0 %748, %v336
    %v750 = vpop.permute.xlu0 %749
    %753 = vset.pattern.permute.xlu0 0
    %754 = vperm.xlu0 %753, %v337
    %v755 = vpop.permute.xlu0 %754
    %758 = vset.pattern.permute.xlu0 0
    %759 = vperm.xlu0 %758, %v338
    %v760 = vpop.permute.xlu0 %759
    %763 = vset.pattern.permute.xlu0 0
    %764 = vperm.xlu0 %763, %v339
    %v765 = vpop.permute.xlu0 %764
    %768 = vset.pattern.permute.xlu0 0
    %769 = vperm.xlu0 %768, %v340
    %v770 = vpop.permute.xlu0 %769
    %773 = vset.pattern.permute.xlu0 0
    %774 = vperm.xlu0 %773, %v341
    %v775 = vpop.permute.xlu0 %774
    %778 = vset.pattern.permute.xlu0 0
    %779 = vperm.xlu0 %778, %v342
    %v780 = vpop.permute.xlu0 %779
    %783 = vset.pattern.permute.xlu0 0
    %784 = vperm.xlu0 %783, %v343
    %v785 = vpop.permute.xlu0 %784
    %788 = vset.pattern.permute.xlu0 0
    %789 = vperm.xlu0 %788, %v344
    %v790 = vpop.permute.xlu0 %789
    %793 = vset.pattern.permute.xlu0 0
    %794 = vperm.xlu0 %793, %v345
    %v795 = vpop.permute.xlu0 %794
    %v797 = vsub.f32 %v266, %v720
    %v798 = vsub.f32 %v267, %v725
    %v799 = vsub.f32 %v268, %v730
    %v800 = vsub.f32 %v269, %v735
    %v801 = vsub.f32 %v270, %v740
    %v802 = vsub.f32 %v271, %v745
    %v803 = vsub.f32 %v272, %v750
    %v804 = vsub.f32 %v273, %v755
    %v805 = vsub.f32 %v274, %v760
    %v806 = vsub.f32 %v275, %v765
    %v807 = vsub.f32 %v276, %v770
    %v808 = vsub.f32 %v277, %v775
    %v809 = vsub.f32 %v278, %v780
    %v810 = vsub.f32 %v279, %v785
    %v811 = vsub.f32 %v280, %v790
    %v812 = vsub.f32 %v281, %v795
    %v813 = vmul.f32 %v797, 1.442695
    %v814 = vpow.pop %v813
    %v815 = vmul.f32 %v798, 1.442695
    %v816 = vpow.pop %v815
    %v817 = vmul.f32 %v799, 1.442695
    %v818 = vpow.pop %v817
    %v819 = vmul.f32 %v800, 1.442695
    %v820 = vpow.pop %v819
    %v821 = vmul.f32 %v801, 1.442695
    %v822 = vpow.pop %v821
    %v823 = vmul.f32 %v802, 1.442695
    %v824 = vpow.pop %v823
    %v825 = vmul.f32 %v803, 1.442695
    %v826 = vpow.pop %v825
    %v827 = vmul.f32 %v804, 1.442695
    %v828 = vpow.pop %v827
    %v829 = vmul.f32 %v805, 1.442695
    %v830 = vpow.pop %v829
    %v831 = vmul.f32 %v806, 1.442695
    %v832 = vpow.pop %v831
    %v833 = vmul.f32 %v807, 1.442695
    %v834 = vpow.pop %v833
    %v835 = vmul.f32 %v808, 1.442695
    %v836 = vpow.pop %v835
    %v837 = vmul.f32 %v809, 1.442695
    %v838 = vpow.pop %v837
    %v839 = vmul.f32 %v810, 1.442695
    %v840 = vpow.pop %v839
    %v841 = vmul.f32 %v811, 1.442695
    %v842 = vpow.pop %v841
    %v843 = vmul.f32 %v812, 1.442695
    %v844 = vpow.pop %v843
    %v845 = vld [vmem:[#allocation3] sm:$0xff]
    %v846 = vld [vmem:[#allocation3 + $0x8] sm:$0xff]
    %v847 = vld [vmem:[#allocation3 + $0x10] sm:$0xff]
    %v848 = vld [vmem:[#allocation3 + $0x18] sm:$0xff]
    %v849 = vld [vmem:[#allocation3 + $0x20] sm:$0xff]
    %v850 = vld [vmem:[#allocation3 + $0x28] sm:$0xff]
    %v851 = vld [vmem:[#allocation3 + $0x30] sm:$0xff]
    %v852 = vld [vmem:[#allocation3 + $0x38] sm:$0xff]
    %v853 = vld [vmem:[#allocation3 + $0x40] sm:$0xff]
    %v854 = vld [vmem:[#allocation3 + $0x48] sm:$0xff]
    %v855 = vld [vmem:[#allocation3 + $0x50] sm:$0xff]
    %v856 = vld [vmem:[#allocation3 + $0x58] sm:$0xff]
    %v857 = vld [vmem:[#allocation3 + $0x60] sm:$0xff]
    %v858 = vld [vmem:[#allocation3 + $0x68] sm:$0xff]
    %v859 = vld [vmem:[#allocation3 + $0x70] sm:$0xff]
    %v860 = vld [vmem:[#allocation3 + $0x78] sm:$0xff]
    %v861 = vmul.f32 %v363, %v845
    %v862 = vmul.f32 %v365, %v846
    %v863 = vmul.f32 %v367, %v847
    %v864 = vmul.f32 %v369, %v848
    %v865 = vmul.f32 %v371, %v849
    %v866 = vmul.f32 %v373, %v850
    %v867 = vmul.f32 %v375, %v851
    %v868 = vmul.f32 %v377, %v852
    %v869 = vmul.f32 %v379, %v853
    %v870 = vmul.f32 %v381, %v854
    %v871 = vmul.f32 %v383, %v855
    %v872 = vmul.f32 %v385, %v856
    %v873 = vmul.f32 %v387, %v857
    %v874 = vmul.f32 %v389, %v858
    %v875 = vmul.f32 %v391, %v859
    %v876 = vmul.f32 %v393, %v860
    %877 = vadd.xlane.f32.xlu0 %v814
    %v878 = vpop.xlane.xlu0 %877
    %879 = vadd.xlane.f32.xlu0 %v816
    %v880 = vpop.xlane.xlu0 %879
    %881 = vadd.xlane.f32.xlu0 %v818
    %v882 = vpop.xlane.xlu0 %881
    %883 = vadd.xlane.f32.xlu0 %v820
    %v884 = vpop.xlane.xlu0 %883
    %885 = vadd.xlane.f32.xlu0 %v822
    %v886 = vpop.xlane.xlu0 %885
    %887 = vadd.xlane.f32.xlu0 %v824
    %v888 = vpop.xlane.xlu0 %887
    %889 = vadd.xlane.f32.xlu0 %v826
    %v890 = vpop.xlane.xlu0 %889
    %891 = vadd.xlane.f32.xlu0 %v828
    %v892 = vpop.xlane.xlu0 %891
    %893 = vadd.xlane.f32.xlu0 %v830
    %v894 = vpop.xlane.xlu0 %893
    %895 = vadd.xlane.f32.xlu0 %v832
    %v896 = vpop.xlane.xlu0 %895
    %897 = vadd.xlane.f32.xlu0 %v834
    %v898 = vpop.xlane.xlu0 %897
    %899 = vadd.xlane.f32.xlu0 %v836
    %v900 = vpop.xlane.xlu0 %899
    %901 = vadd.xlane.f32.xlu0 %v838
    %v902 = vpop.xlane.xlu0 %901
    %903 = vadd.xlane.f32.xlu0 %v840
    %v904 = vpop.xlane.xlu0 %903
    %905 = vadd.xlane.f32.xlu0 %v842
    %v906 = vpop.xlane.xlu0 %905
    %907 = vadd.xlane.f32.xlu0 %v844
    %v908 = vpop.xlane.xlu0 %907
    %v909 = vadd.f32 %v861, %v878
    %v910 = vadd.f32 %v862, %v880
    %v911 = vadd.f32 %v863, %v882
    %v912 = vadd.f32 %v864, %v884
    %v913 = vadd.f32 %v865, %v886
    %v914 = vadd.f32 %v866, %v888
    %v915 = vadd.f32 %v867, %v890
    %v916 = vadd.f32 %v868, %v892
    %v917 = vadd.f32 %v869, %v894
    %v918 = vadd.f32 %v870, %v896
    %v919 = vadd.f32 %v871, %v898
    %v920 = vadd.f32 %v872, %v900
    %v921 = vadd.f32 %v873, %v902
    %v922 = vadd.f32 %v874, %v904
    %v923 = vadd.f32 %v875, %v906
    %v924 = vadd.f32 %v876, %v908
    %925 = vst.msk [vmem:[#allocation3] sm:$0xff] %vm394, %v909
    %926 = vst.msk [vmem:[#allocation3 + $0x8] sm:$0xff] %vm394, %v910
    %927 = vst.msk [vmem:[#allocation3 + $0x10] sm:$0xff] %vm394, %v911
    %928 = vst.msk [vmem:[#allocation3 + $0x18] sm:$0xff] %vm394, %v912
    %929 = vst.msk [vmem:[#allocation3 + $0x20] sm:$0xff] %vm394, %v913
    %930 = vst.msk [vmem:[#allocation3 + $0x28] sm:$0xff] %vm394, %v914
    %931 = vst.msk [vmem:[#allocation3 + $0x30] sm:$0xff] %vm394, %v915
    %932 = vst.msk [vmem:[#allocation3 + $0x38] sm:$0xff] %vm394, %v916
    %933 = vst.msk [vmem:[#allocation3 + $0x40] sm:$0xff] %vm394, %v917
    %934 = vst.msk [vmem:[#allocation3 + $0x48] sm:$0xff] %vm394, %v918
    %935 = vst.msk [vmem:[#allocation3 + $0x50] sm:$0xff] %vm394, %v919
    %936 = vst.msk [vmem:[#allocation3 + $0x58] sm:$0xff] %vm394, %v920
    %937 = vst.msk [vmem:[#allocation3 + $0x60] sm:$0xff] %vm394, %v921
    %938 = vst.msk [vmem:[#allocation3 + $0x68] sm:$0xff] %vm394, %v922
    %939 = vst.msk [vmem:[#allocation3 + $0x70] sm:$0xff] %vm394, %v923
    %940 = vst.msk [vmem:[#allocation3 + $0x78] sm:$0xff] %vm394, %v924
  $region45: #{tpu_custom_call.1} parent=0 // pred_fallthru
    _
  %v941 = vld [vmem:[%s2] sm:$0xff]
  %v942 = vld [vmem:[%s2 + $0x8] sm:$0xff]
  %v943 = vld [vmem:[%s2 + $0x10] sm:$0xff]
  %v944 = vld [vmem:[%s2 + $0x18] sm:$0xff]
  %v945 = vld [vmem:[%s2 + $0x20] sm:$0xff]
  %v946 = vld [vmem:[%s2 + $0x28] sm:$0xff]
  %v947 = vld [vmem:[%s2 + $0x30] sm:$0xff]
  %v948 = vld [vmem:[%s2 + $0x38] sm:$0xff]
  %v949 = vld [vmem:[%s2 + $0x40] sm:$0xff]
  %v950 = vld [vmem:[%s2 + $0x48] sm:$0xff]
  %v951 = vld [vmem:[%s2 + $0x50] sm:$0xff]
  %v952 = vld [vmem:[%s2 + $0x58] sm:$0xff]
  %v953 = vld [vmem:[%s2 + $0x60] sm:$0xff]
  %v954 = vld [vmem:[%s2 + $0x68] sm:$0xff]
  %v955 = vld [vmem:[%s2 + $0x70] sm:$0xff]
  %v956 = vld [vmem:[%s2 + $0x78] sm:$0xff]
  %v957 = vld [vmem:[%s3] sm:$0x1]
  %958 = vset.pattern.permute.xlu0 0
  %959 = vperm.xlu0 %958, %v941
  %v960 = vpop.permute.xlu0 %959
  %961 = vset.pattern.permute.xlu0 0
  %962 = vperm.xlu0 %961, %v942
  %v963 = vpop.permute.xlu0 %962
  %964 = vset.pattern.permute.xlu0 0
  %965 = vperm.xlu0 %964, %v943
  %v966 = vpop.permute.xlu0 %965
  %967 = vset.pattern.permute.xlu0 0
  %968 = vperm.xlu0 %967, %v944
  %v969 = vpop.permute.xlu0 %968
  %970 = vset.pattern.permute.xlu0 0
  %971 = vperm.xlu0 %970, %v945
  %v972 = vpop.permute.xlu0 %971
  %973 = vset.pattern.permute.xlu0 0
  %974 = vperm.xlu0 %973, %v946
  %v975 = vpop.permute.xlu0 %974
  %976 = vset.pattern.permute.xlu0 0
  %977 = vperm.xlu0 %976, %v947
  %v978 = vpop.permute.xlu0 %977
  %979 = vset.pattern.permute.xlu0 0
  %980 = vperm.xlu0 %979, %v948
  %v981 = vpop.permute.xlu0 %980
  %982 = vset.pattern.permute.xlu0 0
  %983 = vperm.xlu0 %982, %v949
  %v984 = vpop.permute.xlu0 %983
  %985 = vset.pattern.permute.xlu0 0
  %986 = vperm.xlu0 %985, %v950
  %v987 = vpop.permute.xlu0 %986
  %988 = vset.pattern.permute.xlu0 0
  %989 = vperm.xlu0 %988, %v951
  %v990 = vpop.permute.xlu0 %989
  %991 = vset.pattern.permute.xlu0 0
  %992 = vperm.xlu0 %991, %v952
  %v993 = vpop.permute.xlu0 %992
  %994 = vset.pattern.permute.xlu0 0
  %995 = vperm.xlu0 %994, %v953
  %v996 = vpop.permute.xlu0 %995
  %997 = vset.pattern.permute.xlu0 0
  %998 = vperm.xlu0 %997, %v954
  %v999 = vpop.permute.xlu0 %998
  %1000 = vset.pattern.permute.xlu0 0
  %1001 = vperm.xlu0 %1000, %v955
  %v1002 = vpop.permute.xlu0 %1001
  %1003 = vset.pattern.permute.xlu0 0
  %1004 = vperm.xlu0 %1003, %v956
  %v1005 = vpop.permute.xlu0 %1004
  %v1006 = vlaneseq
  %v1007 = vshrl.u32 %v1006, 7
  %v1008 = vsub.s32 0, %v1007
  %v1009 = vrot.slane %v957, %v1008
  %vm1010 = vcmp.eq.s32.totalorder %v960, %v1009
  %vm1011 = vcmp.eq.s32.totalorder %v963, %v1009
  %vm1012 = vcmp.eq.s32.totalorder %v966, %v1009
  %vm1013 = vcmp.eq.s32.totalorder %v969, %v1009
  %vm1014 = vcmp.eq.s32.totalorder %v972, %v1009
  %vm1015 = vcmp.eq.s32.totalorder %v975, %v1009
  %vm1016 = vcmp.eq.s32.totalorder %v978, %v1009
  %vm1017 = vcmp.eq.s32.totalorder %v981, %v1009
  %vm1018 = vcmp.eq.s32.totalorder %v984, %v1009
  %vm1019 = vcmp.eq.s32.totalorder %v987, %v1009
  %vm1020 = vcmp.eq.s32.totalorder %v990, %v1009
  %vm1021 = vcmp.eq.s32.totalorder %v993, %v1009
  %vm1022 = vcmp.eq.s32.totalorder %v996, %v1009
  %vm1023 = vcmp.eq.s32.totalorder %v999, %v1009
  %vm1024 = vcmp.eq.s32.totalorder %v1002, %v1009
  %vm1025 = vcmp.eq.s32.totalorder %v1005, %v1009
  %v1026 = vld [vmem:[%s4] sm:$0xff]
  %v1027 = vld [vmem:[%s4 + $0x8] sm:$0xff]
  %v1028 = vld [vmem:[%s4 + $0x10] sm:$0xff]
  %v1029 = vld [vmem:[%s4 + $0x18] sm:$0xff]
  %v1030 = vld [vmem:[%s4 + $0x20] sm:$0xff]
  %v1031 = vld [vmem:[%s4 + $0x28] sm:$0xff]
  %v1032 = vld [vmem:[%s4 + $0x30] sm:$0xff]
  %v1033 = vld [vmem:[%s4 + $0x38] sm:$0xff]
  %v1034 = vld [vmem:[%s4 + $0x40] sm:$0xff]
  %v1035 = vld [vmem:[%s4 + $0x48] sm:$0xff]
  %v1036 = vld [vmem:[%s4 + $0x50] sm:$0xff]
  %v1037 = vld [vmem:[%s4 + $0x58] sm:$0xff]
  %v1038 = vld [vmem:[%s4 + $0x60] sm:$0xff]
  %v1039 = vld [vmem:[%s4 + $0x68] sm:$0xff]
  %v1040 = vld [vmem:[%s4 + $0x70] sm:$0xff]
  %v1041 = vld [vmem:[%s4 + $0x78] sm:$0xff]
  %v1042 = vld [vmem:[%s5] sm:$0x1]
  %1043 = vset.pattern.permute.xlu0 0
  %1044 = vperm.xlu0 %1043, %v1026
  %v1045 = vpop.permute.xlu0 %1044
  %1046 = vset.pattern.permute.xlu0 0
  %1047 = vperm.xlu0 %1046, %v1027
  %v1048 = vpop.permute.xlu0 %1047
  %1049 = vset.pattern.permute.xlu0 0
  %1050 = vperm.xlu0 %1049, %v1028
  %v1051 = vpop.permute.xlu0 %1050
  %1052 = vset.pattern.permute.xlu0 0
  %1053 = vperm.xlu0 %1052, %v1029
  %v1054 = vpop.permute.xlu0 %1053
  %1055 = vset.pattern.permute.xlu0 0
  %1056 = vperm.xlu0 %1055, %v1030
  %v1057 = vpop.permute.xlu0 %1056
  %1058 = vset.pattern.permute.xlu0 0
  %1059 = vperm.xlu0 %1058, %v1031
  %v1060 = vpop.permute.xlu0 %1059
  %1061 = vset.pattern.permute.xlu0 0
  %1062 = vperm.xlu0 %1061, %v1032
  %v1063 = vpop.permute.xlu0 %1062
  %1064 = vset.pattern.permute.xlu0 0
  %1065 = vperm.xlu0 %1064, %v1033
  %v1066 = vpop.permute.xlu0 %1065
  %1067 = vset.pattern.permute.xlu0 0
  %1068 = vperm.xlu0 %1067, %v1034
  %v1069 = vpop.permute.xlu0 %1068
  %1070 = vset.pattern.permute.xlu0 0
  %1071 = vperm.xlu0 %1070, %v1035
  %v1072 = vpop.permute.xlu0 %1071
  %1073 = vset.pattern.permute.xlu0 0
  %1074 = vperm.xlu0 %1073, %v1036
  %v1075 = vpop.permute.xlu0 %1074
  %1076 = vset.pattern.permute.xlu0 0
  %1077 = vperm.xlu0 %1076, %v1037
  %v1078 = vpop.permute.xlu0 %1077
  %1079 = vset.pattern.permute.xlu0 0
  %1080 = vperm.xlu0 %1079, %v1038
  %v1081 = vpop.permute.xlu0 %1080
  %1082 = vset.pattern.permute.xlu0 0
  %1083 = vperm.xlu0 %1082, %v1039
  %v1084 = vpop.permute.xlu0 %1083
  %1085 = vset.pattern.permute.xlu0 0
  %1086 = vperm.xlu0 %1085, %v1040
  %v1087 = vpop.permute.xlu0 %1086
  %1088 = vset.pattern.permute.xlu0 0
  %1089 = vperm.xlu0 %1088, %v1041
  %v1090 = vpop.permute.xlu0 %1089
  %v1091 = vlaneseq
  %v1092 = vshrl.u32 %v1091, 7
  %v1093 = vsub.s32 0, %v1092
  %v1094 = vrot.slane %v1042, %v1093
  %vm1095 = vcmp.ne.s32.totalorder %v1045, %v1094
  %vm1096 = vcmp.ne.s32.totalorder %v1048, %v1094
  %vm1097 = vcmp.ne.s32.totalorder %v1051, %v1094
  %vm1098 = vcmp.ne.s32.totalorder %v1054, %v1094
  %vm1099 = vcmp.ne.s32.totalorder %v1057, %v1094
  %vm1100 = vcmp.ne.s32.totalorder %v1060, %v1094
  %vm1101 = vcmp.ne.s32.totalorder %v1063, %v1094
  %vm1102 = vcmp.ne.s32.totalorder %v1066, %v1094
  %vm1103 = vcmp.ne.s32.totalorder %v1069, %v1094
  %vm1104 = vcmp.ne.s32.totalorder %v1072, %v1094
  %vm1105 = vcmp.ne.s32.totalorder %v1075, %v1094
  %vm1106 = vcmp.ne.s32.totalorder %v1078, %v1094
  %vm1107 = vcmp.ne.s32.totalorder %v1081, %v1094
  %vm1108 = vcmp.ne.s32.totalorder %v1084, %v1094
  %vm1109 = vcmp.ne.s32.totalorder %v1087, %v1094
  %vm1110 = vcmp.ne.s32.totalorder %v1090, %v1094
  %vm1111 = vmand %vm1010, %vm1095
  %vm1112 = vmand %vm1011, %vm1096
  %vm1113 = vmand %vm1012, %vm1097
  %vm1114 = vmand %vm1013, %vm1098
  %vm1115 = vmand %vm1014, %vm1099
  %vm1116 = vmand %vm1015, %vm1100
  %vm1117 = vmand %vm1016, %vm1101
  %vm1118 = vmand %vm1017, %vm1102
  %vm1119 = vmand %vm1018, %vm1103
  %vm1120 = vmand %vm1019, %vm1104
  %vm1121 = vmand %vm1020, %vm1105
  %vm1122 = vmand %vm1021, %vm1106
  %vm1123 = vmand %vm1022, %vm1107
  %vm1124 = vmand %vm1023, %vm1108
  %vm1125 = vmand %vm1024, %vm1109
  %vm1126 = vmand %vm1025, %vm1110
  %v1127 = vld [vmem:[#allocation4] sm:$0xff]
  %v1128 = vld [vmem:[#allocation4 + $0x8] sm:$0xff]
  %v1129 = vld [vmem:[#allocation4 + $0x10] sm:$0xff]
  %v1130 = vld [vmem:[#allocation4 + $0x18] sm:$0xff]
  %v1131 = vld [vmem:[#allocation4 + $0x20] sm:$0xff]
  %v1132 = vld [vmem:[#allocation4 + $0x28] sm:$0xff]
  %v1133 = vld [vmem:[#allocation4 + $0x30] sm:$0xff]
  %v1134 = vld [vmem:[#allocation4 + $0x38] sm:$0xff]
  %v1135 = vld [vmem:[#allocation4 + $0x40] sm:$0xff]
  %v1136 = vld [vmem:[#allocation4 + $0x48] sm:$0xff]
  %v1137 = vld [vmem:[#allocation4 + $0x50] sm:$0xff]
  %v1138 = vld [vmem:[#allocation4 + $0x58] sm:$0xff]
  %v1139 = vld [vmem:[#allocation4 + $0x60] sm:$0xff]
  %v1140 = vld [vmem:[#allocation4 + $0x68] sm:$0xff]
  %v1141 = vld [vmem:[#allocation4 + $0x70] sm:$0xff]
  %v1142 = vld [vmem:[#allocation4 + $0x78] sm:$0xff]
  %v1143 = vsel %vm1111, %v181, 0.0
  %v1144 = vsel %vm1112, %v186, 0.0
  %v1145 = vsel %vm1113, %v191, 0.0
  %v1146 = vsel %vm1114, %v196, 0.0
  %v1147 = vsel %vm1115, %v201, 0.0
  %v1148 = vsel %vm1116, %v206, 0.0
  %v1149 = vsel %vm1117, %v211, 0.0
  %v1150 = vsel %vm1118, %v216, 0.0
  %v1151 = vsel %vm1119, %v221, 0.0
  %v1152 = vsel %vm1120, %v226, 0.0
  %v1153 = vsel %vm1121, %v231, 0.0
  %v1154 = vsel %vm1122, %v236, 0.0
  %v1155 = vsel %vm1123, %v241, 0.0
  %v1156 = vsel %vm1124, %v246, 0.0
  %v1157 = vsel %vm1125, %v251, 0.0
  %v1158 = vsel %vm1126, %v256, 0.0
  %1159 = vadd.xlane.f32.xlu0 %v1143
  %v1160 = vpop.xlane.xlu0 %1159
  %1161 = vadd.xlane.f32.xlu0 %v1144
  %v1162 = vpop.xlane.xlu0 %1161
  %1163 = vadd.xlane.f32.xlu0 %v1145
  %v1164 = vpop.xlane.xlu0 %1163
  %1165 = vadd.xlane.f32.xlu0 %v1146
  %v1166 = vpop.xlane.xlu0 %1165
  %1167 = vadd.xlane.f32.xlu0 %v1147
  %v1168 = vpop.xlane.xlu0 %1167
  %1169 = vadd.xlane.f32.xlu0 %v1148
  %v1170 = vpop.xlane.xlu0 %1169
  %1171 = vadd.xlane.f32.xlu0 %v1149
  %v1172 = vpop.xlane.xlu0 %1171
  %1173 = vadd.xlane.f32.xlu0 %v1150
  %v1174 = vpop.xlane.xlu0 %1173
  %1175 = vadd.xlane.f32.xlu0 %v1151
  %v1176 = vpop.xlane.xlu0 %1175
  %1177 = vadd.xlane.f32.xlu0 %v1152
  %v1178 = vpop.xlane.xlu0 %1177
  %1179 = vadd.xlane.f32.xlu0 %v1153
  %v1180 = vpop.xlane.xlu0 %1179
  %1181 = vadd.xlane.f32.xlu0 %v1154
  %v1182 = vpop.xlane.xlu0 %1181
  %1183 = vadd.xlane.f32.xlu0 %v1155
  %v1184 = vpop.xlane.xlu0 %1183
  %1185 = vadd.xlane.f32.xlu0 %v1156
  %v1186 = vpop.xlane.xlu0 %1185
  %1187 = vadd.xlane.f32.xlu0 %v1157
  %v1188 = vpop.xlane.xlu0 %1187
  %1189 = vadd.xlane.f32.xlu0 %v1158
  %v1190 = vpop.xlane.xlu0 %1189
  %v1191 = vadd.f32 %v1127, %v1160
  %v1192 = vadd.f32 %v1128, %v1162
  %v1193 = vadd.f32 %v1129, %v1164
  %v1194 = vadd.f32 %v1130, %v1166
  %v1195 = vadd.f32 %v1131, %v1168
  %v1196 = vadd.f32 %v1132, %v1170
  %v1197 = vadd.f32 %v1133, %v1172
  %v1198 = vadd.f32 %v1134, %v1174
  %v1199 = vadd.f32 %v1135, %v1176
  %v1200 = vadd.f32 %v1136, %v1178
  %v1201 = vadd.f32 %v1137, %v1180
  %v1202 = vadd.f32 %v1138, %v1182
  %v1203 = vadd.f32 %v1139, %v1184
  %v1204 = vadd.f32 %v1140, %v1186
  %v1205 = vadd.f32 %v1141, %v1188
  %v1206 = vadd.f32 %v1142, %v1190
  %1207 = vst.msk [vmem:[#allocation4] sm:$0xff] %vm394, %v1191
  %1208 = vst.msk [vmem:[#allocation4 + $0x8] sm:$0xff] %vm394, %v1192
  %1209 = vst.msk [vmem:[#allocation4 + $0x10] sm:$0xff] %vm394, %v1193
  %1210 = vst.msk [vmem:[#allocation4 + $0x18] sm:$0xff] %vm394, %v1194
  %1211 = vst.msk [vmem:[#allocation4 + $0x20] sm:$0xff] %vm394, %v1195
  %1212 = vst.msk [vmem:[#allocation4 + $0x28] sm:$0xff] %vm394, %v1196
  %1213 = vst.msk [vmem:[#allocation4 + $0x30] sm:$0xff] %vm394, %v1197
  %1214 = vst.msk [vmem:[#allocation4 + $0x38] sm:$0xff] %vm394, %v1198
  %1215 = vst.msk [vmem:[#allocation4 + $0x40] sm:$0xff] %vm394, %v1199
  %1216 = vst.msk [vmem:[#allocation4 + $0x48] sm:$0xff] %vm394, %v1200
  %1217 = vst.msk [vmem:[#allocation4 + $0x50] sm:$0xff] %vm394, %v1201
  %1218 = vst.msk [vmem:[#allocation4 + $0x58] sm:$0xff] %vm394, %v1202
  %1219 = vst.msk [vmem:[#allocation4 + $0x60] sm:$0xff] %vm394, %v1203
  %1220 = vst.msk [vmem:[#allocation4 + $0x68] sm:$0xff] %vm394, %v1204
  %1221 = vst.msk [vmem:[#allocation4 + $0x70] sm:$0xff] %vm394, %v1205
  %1222 = vst.msk [vmem:[#allocation4 + $0x78] sm:$0xff] %vm394, %v1206
  // Predicated region
  $region46: #{tpu_custom_call.1} parent=0 // pred_check
    %p1223 = pneg %p29
  $region47: #{tpu_custom_call.1} parent=0 // pred_check_branch
    %1225 = sbr.rel (%p1223) target = $region49
  $region48: #{tpu_custom_call.1} parent=0 // pred_region
    %v1226 = vld [vmem:[%s7] sm:$0xff]
    %v1227 = vld [vmem:[%s7 + $0x8] sm:$0xff]
    %v1228 = vld [vmem:[%s7 + $0x10] sm:$0xff]
    %v1229 = vld [vmem:[%s7 + $0x18] sm:$0xff]
    %v1230 = vld [vmem:[%s7 + $0x20] sm:$0xff]
    %v1231 = vld [vmem:[%s7 + $0x28] sm:$0xff]
    %v1232 = vld [vmem:[%s7 + $0x30] sm:$0xff]
    %v1233 = vld [vmem:[%s7 + $0x38] sm:$0xff]
    %v1234 = vld [vmem:[%s7 + $0x40] sm:$0xff]
    %v1235 = vld [vmem:[%s7 + $0x48] sm:$0xff]
    %v1236 = vld [vmem:[%s7 + $0x50] sm:$0xff]
    %v1237 = vld [vmem:[%s7 + $0x58] sm:$0xff]
    %v1238 = vld [vmem:[%s7 + $0x60] sm:$0xff]
    %v1239 = vld [vmem:[%s7 + $0x68] sm:$0xff]
    %v1240 = vld [vmem:[%s7 + $0x70] sm:$0xff]
    %v1241 = vld [vmem:[%s7 + $0x78] sm:$0xff]
    %vm1242 = vcmp.eq.f32.partialorder %v1226, 0.0
    %vm1243 = vcmp.eq.f32.partialorder %v1227, 0.0
    %vm1244 = vcmp.eq.f32.partialorder %v1228, 0.0
    %vm1245 = vcmp.eq.f32.partialorder %v1229, 0.0
    %vm1246 = vcmp.eq.f32.partialorder %v1230, 0.0
    %vm1247 = vcmp.eq.f32.partialorder %v1231, 0.0
    %vm1248 = vcmp.eq.f32.partialorder %v1232, 0.0
    %vm1249 = vcmp.eq.f32.partialorder %v1233, 0.0
    %vm1250 = vcmp.eq.f32.partialorder %v1234, 0.0
    %vm1251 = vcmp.eq.f32.partialorder %v1235, 0.0
    %vm1252 = vcmp.eq.f32.partialorder %v1236, 0.0
    %vm1253 = vcmp.eq.f32.partialorder %v1237, 0.0
    %vm1254 = vcmp.eq.f32.partialorder %v1238, 0.0
    %vm1255 = vcmp.eq.f32.partialorder %v1239, 0.0
    %vm1256 = vcmp.eq.f32.partialorder %v1240, 0.0
    %vm1257 = vcmp.eq.f32.partialorder %v1241, 0.0
    %v1258 = vsel %vm1242, 1.0, %v1226
    %v1259 = vsel %vm1243, 1.0, %v1227
    %v1260 = vsel %vm1244, 1.0, %v1228
    %v1261 = vsel %vm1245, 1.0, %v1229
    %v1262 = vsel %vm1246, 1.0, %v1230
    %v1263 = vsel %vm1247, 1.0, %v1231
    %v1264 = vsel %vm1248, 1.0, %v1232
    %v1265 = vsel %vm1249, 1.0, %v1233
    %v1266 = vsel %vm1250, 1.0, %v1234
    %v1267 = vsel %vm1251, 1.0, %v1235
    %v1268 = vsel %vm1252, 1.0, %v1236
    %v1269 = vsel %vm1253, 1.0, %v1237
    %v1270 = vsel %vm1254, 1.0, %v1238
    %v1271 = vsel %vm1255, 1.0, %v1239
    %v1272 = vsel %vm1256, 1.0, %v1240
    %v1273 = vsel %vm1257, 1.0, %v1241
    %v1274 = vld [vmem:[#allocation2] sm:$0xff]
    %v1275 = vld [vmem:[#allocation2 + $0x8] sm:$0xff]
    %v1276 = vld [vmem:[#allocation2 + $0x10] sm:$0xff]
    %v1277 = vld [vmem:[#allocation2 + $0x18] sm:$0xff]
    %v1278 = vld [vmem:[#allocation2 + $0x20] sm:$0xff]
    %v1279 = vld [vmem:[#allocation2 + $0x28] sm:$0xff]
    %v1280 = vld [vmem:[#allocation2 + $0x30] sm:$0xff]
    %v1281 = vld [vmem:[#allocation2 + $0x38] sm:$0xff]
    %v1282 = vld [vmem:[#allocation2 + $0x40] sm:$0xff]
    %v1283 = vld [vmem:[#allocation2 + $0x48] sm:$0xff]
    %v1284 = vld [vmem:[#allocation2 + $0x50] sm:$0xff]
    %v1285 = vld [vmem:[#allocation2 + $0x58] sm:$0xff]
    %v1286 = vld [vmem:[#allocation2 + $0x60] sm:$0xff]
    %v1287 = vld [vmem:[#allocation2 + $0x68] sm:$0xff]
    %v1288 = vld [vmem:[#allocation2 + $0x70] sm:$0xff]
    %v1289 = vld [vmem:[#allocation2 + $0x78] sm:$0xff]
    %v1290 = vld [vmem:[#allocation3] sm:$0xff]
    %v1291 = vld [vmem:[#allocation3 + $0x8] sm:$0xff]
    %v1292 = vld [vmem:[#allocation3 + $0x10] sm:$0xff]
    %v1293 = vld [vmem:[#allocation3 + $0x18] sm:$0xff]
    %v1294 = vld [vmem:[#allocation3 + $0x20] sm:$0xff]
    %v1295 = vld [vmem:[#allocation3 + $0x28] sm:$0xff]
    %v1296 = vld [vmem:[#allocation3 + $0x30] sm:$0xff]
    %v1297 = vld [vmem:[#allocation3 + $0x38] sm:$0xff]
    %v1298 = vld [vmem:[#allocation3 + $0x40] sm:$0xff]
    %v1299 = vld [vmem:[#allocation3 + $0x48] sm:$0xff]
    %v1300 = vld [vmem:[#allocation3 + $0x50] sm:$0xff]
    %v1301 = vld [vmem:[#allocation3 + $0x58] sm:$0xff]
    %v1302 = vld [vmem:[#allocation3 + $0x60] sm:$0xff]
    %v1303 = vld [vmem:[#allocation3 + $0x68] sm:$0xff]
    %v1304 = vld [vmem:[#allocation3 + $0x70] sm:$0xff]
    %v1305 = vld [vmem:[#allocation3 + $0x78] sm:$0xff]
    %v1306 = vadd.f32 %v1290, 1e-09
    %v1307 = vadd.f32 %v1291, 1e-09
    %v1308 = vadd.f32 %v1292, 1e-09
    %v1309 = vadd.f32 %v1293, 1e-09
    %v1310 = vadd.f32 %v1294, 1e-09
    %v1311 = vadd.f32 %v1295, 1e-09
    %v1312 = vadd.f32 %v1296, 1e-09
    %v1313 = vadd.f32 %v1297, 1e-09
    %v1314 = vadd.f32 %v1298, 1e-09
    %v1315 = vadd.f32 %v1299, 1e-09
    %v1316 = vadd.f32 %v1300, 1e-09
    %v1317 = vadd.f32 %v1301, 1e-09
    %v1318 = vadd.f32 %v1302, 1e-09
    %v1319 = vadd.f32 %v1303, 1e-09
    %v1320 = vadd.f32 %v1304, 1e-09
    %v1321 = vadd.f32 %v1305, 1e-09
    %v1322 = vlog2.pop %v1306
    %v1323 = vmul.f32 %v1322, 0.6931472
    %v1324 = vlog2.pop %v1307
    %v1325 = vmul.f32 %v1324, 0.6931472
    %v1326 = vlog2.pop %v1308
    %v1327 = vmul.f32 %v1326, 0.6931472
    %v1328 = vlog2.pop %v1309
    %v1329 = vmul.f32 %v1328, 0.6931472
    %v1330 = vlog2.pop %v1310
    %v1331 = vmul.f32 %v1330, 0.6931472
    %v1332 = vlog2.pop %v1311
    %v1333 = vmul.f32 %v1332, 0.6931472
    %v1334 = vlog2.pop %v1312
    %v1335 = vmul.f32 %v1334, 0.6931472
    %v1336 = vlog2.pop %v1313
    %v1337 = vmul.f32 %v1336, 0.6931472
    %v1338 = vlog2.pop %v1314
    %v1339 = vmul.f32 %v1338, 0.6931472
    %v1340 = vlog2.pop %v1315
    %v1341 = vmul.f32 %v1340, 0.6931472
    %v1342 = vlog2.pop %v1316
    %v1343 = vmul.f32 %v1342, 0.6931472
    %v1344 = vlog2.pop %v1317
    %v1345 = vmul.f32 %v1344, 0.6931472
    %v1346 = vlog2.pop %v1318
    %v1347 = vmul.f32 %v1346, 0.6931472
    %v1348 = vlog2.pop %v1319
    %v1349 = vmul.f32 %v1348, 0.6931472
    %v1350 = vlog2.pop %v1320
    %v1351 = vmul.f32 %v1350, 0.6931472
    %v1352 = vlog2.pop %v1321
    %v1353 = vmul.f32 %v1352, 0.6931472
    %v1354 = vadd.f32 %v1274, %v1323
    %v1355 = vadd.f32 %v1275, %v1325
    %v1356 = vadd.f32 %v1276, %v1327
    %v1357 = vadd.f32 %v1277, %v1329
    %v1358 = vadd.f32 %v1278, %v1331
    %v1359 = vadd.f32 %v1279, %v1333
    %v1360 = vadd.f32 %v1280, %v1335
    %v1361 = vadd.f32 %v1281, %v1337
    %v1362 = vadd.f32 %v1282, %v1339
    %v1363 = vadd.f32 %v1283, %v1341
    %v1364 = vadd.f32 %v1284, %v1343
    %v1365 = vadd.f32 %v1285, %v1345
    %v1366 = vadd.f32 %v1286, %v1347
    %v1367 = vadd.f32 %v1287, %v1349
    %v1368 = vadd.f32 %v1288, %v1351
    %v1369 = vadd.f32 %v1289, %v1353
    %v1370 = vmul.f32 %v1354, %v1226
    %v1371 = vmul.f32 %v1355, %v1227
    %v1372 = vmul.f32 %v1356, %v1228
    %v1373 = vmul.f32 %v1357, %v1229
    %v1374 = vmul.f32 %v1358, %v1230
    %v1375 = vmul.f32 %v1359, %v1231
    %v1376 = vmul.f32 %v1360, %v1232
    %v1377 = vmul.f32 %v1361, %v1233
    %v1378 = vmul.f32 %v1362, %v1234
    %v1379 = vmul.f32 %v1363, %v1235
    %v1380 = vmul.f32 %v1364, %v1236
    %v1381 = vmul.f32 %v1365, %v1237
    %v1382 = vmul.f32 %v1366, %v1238
    %v1383 = vmul.f32 %v1367, %v1239
    %v1384 = vmul.f32 %v1368, %v1240
    %v1385 = vmul.f32 %v1369, %v1241
    %v1386 = vld [vmem:[#allocation4] sm:$0xff]
    %v1387 = vld [vmem:[#allocation4 + $0x8] sm:$0xff]
    %v1388 = vld [vmem:[#allocation4 + $0x10] sm:$0xff]
    %v1389 = vld [vmem:[#allocation4 + $0x18] sm:$0xff]
    %v1390 = vld [vmem:[#allocation4 + $0x20] sm:$0xff]
    %v1391 = vld [vmem:[#allocation4 + $0x28] sm:$0xff]
    %v1392 = vld [vmem:[#allocation4 + $0x30] sm:$0xff]
    %v1393 = vld [vmem:[#allocation4 + $0x38] sm:$0xff]
    %v1394 = vld [vmem:[#allocation4 + $0x40] sm:$0xff]
    %v1395 = vld [vmem:[#allocation4 + $0x48] sm:$0xff]
    %v1396 = vld [vmem:[#allocation4 + $0x50] sm:$0xff]
    %v1397 = vld [vmem:[#allocation4 + $0x58] sm:$0xff]
    %v1398 = vld [vmem:[#allocation4 + $0x60] sm:$0xff]
    %v1399 = vld [vmem:[#allocation4 + $0x68] sm:$0xff]
    %v1400 = vld [vmem:[#allocation4 + $0x70] sm:$0xff]
    %v1401 = vld [vmem:[#allocation4 + $0x78] sm:$0xff]
    %v1402 = vsub.f32 %v1370, %v1386
    %v1403 = vsub.f32 %v1371, %v1387
    %v1404 = vsub.f32 %v1372, %v1388
    %v1405 = vsub.f32 %v1373, %v1389
    %v1406 = vsub.f32 %v1374, %v1390
    %v1407 = vsub.f32 %v1375, %v1391
    %v1408 = vsub.f32 %v1376, %v1392
    %v1409 = vsub.f32 %v1377, %v1393
    %v1410 = vsub.f32 %v1378, %v1394
    %v1411 = vsub.f32 %v1379, %v1395
    %v1412 = vsub.f32 %v1380, %v1396
    %v1413 = vsub.f32 %v1381, %v1397
    %v1414 = vsub.f32 %v1382, %v1398
    %v1415 = vsub.f32 %v1383, %v1399
    %v1416 = vsub.f32 %v1384, %v1400
    %v1417 = vsub.f32 %v1385, %v1401
    %v1418 = vrcp.pop %v1258
    %v1419 = vmul.f32 %v1402, %v1418
    %v1420 = vrcp.pop %v1259
    %v1421 = vmul.f32 %v1403, %v1420
    %v1422 = vrcp.pop %v1260
    %v1423 = vmul.f32 %v1404, %v1422
    %v1424 = vrcp.pop %v1261
    %v1425 = vmul.f32 %v1405, %v1424
    %v1426 = vrcp.pop %v1262
    %v1427 = vmul.f32 %v1406, %v1426
    %v1428 = vrcp.pop %v1263
    %v1429 = vmul.f32 %v1407, %v1428
    %v1430 = vrcp.pop %v1264
    %v1431 = vmul.f32 %v1408, %v1430
    %v1432 = vrcp.pop %v1265
    %v1433 = vmul.f32 %v1409, %v1432
    %v1434 = vrcp.pop %v1266
    %v1435 = vmul.f32 %v1410, %v1434
    %v1436 = vrcp.pop %v1267
    %v1437 = vmul.f32 %v1411, %v1436
    %v1438 = vrcp.pop %v1268
    %v1439 = vmul.f32 %v1412, %v1438
    %v1440 = vrcp.pop %v1269
    %v1441 = vmul.f32 %v1413, %v1440
    %v1442 = vrcp.pop %v1270
    %v1443 = vmul.f32 %v1414, %v1442
    %v1444 = vrcp.pop %v1271
    %v1445 = vmul.f32 %v1415, %v1444
    %v1446 = vrcp.pop %v1272
    %v1447 = vmul.f32 %v1416, %v1446
    %v1448 = vrcp.pop %v1273
    %v1449 = vmul.f32 %v1417, %v1448
    %1450 = vst.msk [vmem:[%s8] sm:$0xff] %vm394, %v1419
    %1451 = vst.msk [vmem:[%s8 + $0x8] sm:$0xff] %vm394, %v1421
    %1452 = vst.msk [vmem:[%s8 + $0x10] sm:$0xff] %vm394, %v1423
    %1453 = vst.msk [vmem:[%s8 + $0x18] sm:$0xff] %vm394, %v1425
    %1454 = vst.msk [vmem:[%s8 + $0x20] sm:$0xff] %vm394, %v1427
    %1455 = vst.msk [vmem:[%s8 + $0x28] sm:$0xff] %vm394, %v1429
    %1456 = vst.msk [vmem:[%s8 + $0x30] sm:$0xff] %vm394, %v1431
    %1457 = vst.msk [vmem:[%s8 + $0x38] sm:$0xff] %vm394, %v1433
    %1458 = vst.msk [vmem:[%s8 + $0x40] sm:$0xff] %vm394, %v1435
    %1459 = vst.msk [vmem:[%s8 + $0x48] sm:$0xff] %vm394, %v1437
    %1460 = vst.msk [vmem:[%s8 + $0x50] sm:$0xff] %vm394, %v1439
    %1461 = vst.msk [vmem:[%s8 + $0x58] sm:$0xff] %vm394, %v1441
    %1462 = vst.msk [vmem:[%s8 + $0x60] sm:$0xff] %vm394, %v1443
    %1463 = vst.msk [vmem:[%s8 + $0x68] sm:$0xff] %vm394, %v1445
    %1464 = vst.msk [vmem:[%s8 + $0x70] sm:$0xff] %vm394, %v1447
    %1465 = vst.msk [vmem:[%s8 + $0x78] sm:$0xff] %vm394, %v1449
  $region49: #{tpu_custom_call.1} parent=0 // pred_fallthru
    _
  // Predicated region
  $region50: #{tpu_custom_call.1} parent=0 // pred_check
    _
  $region51: #{tpu_custom_call.1} parent=0 // pred_check_branch
    %1467 = sbr.rel (0) target = $region53
  $region52: #{tpu_custom_call.1} parent=0 // pred_region
    _
  $region53: #{tpu_custom_call.1} parent=0 // pred_fallthru
    _
  // Predicated region
  $region54: #{tpu_custom_call.1} parent=0 // pred_check
    _
  $region55: #{tpu_custom_call.1} parent=0 // pred_check_branch
    %1469 = sbr.rel (0) target = $region57
  $region56: #{tpu_custom_call.1} parent=0 // pred_region
    _
  $region57: #{tpu_custom_call.1} parent=0 // pred_fallthru
    _

</llo_original>
